<compile_context>
chip_gen: v6e
topology: v6e:2x2x1
jax: 0.10.0
libtpu: 0.0.40
codegen_flags: <defaults>
</compile_context>

<pallas_src>
import jax
import jax.numpy as jnp
from jax.experimental import pallas as pl
from jax.experimental.pallas import tpu as pltpu

_MIB = 1024 * 1024


# ---------------------------------------------------------------------------
# Kernels
# ---------------------------------------------------------------------------
def mlp_kernel(x_ref, w1_ref, b1_ref, w2_ref, b2_ref, o_ref):
    """Fully-resident-weights path: one grid axis over batch rows."""
    prec = jax.lax.Precision.HIGHEST if w1_ref.dtype == jnp.float32 else None
    x = x_ref[...]
    if x.dtype != w1_ref.dtype:
        x = x.astype(w1_ref.dtype)                       # bf16 MXU operands
    h = jnp.dot(x, w1_ref[...], preferred_element_type=jnp.float32,
                precision=prec)
    h = jnp.maximum(h + b1_ref[...], 0.0)                # bias+ReLU in f32 (VPU)
    y = jnp.dot(h.astype(w2_ref.dtype), w2_ref[...],
                preferred_element_type=jnp.float32, precision=prec)
    o_ref[...] = (y + b2_ref[...]).astype(o_ref.dtype)
    # TODO(synk): for very large H on v7x, chunk H inside the kernel
    # (lax.fori_loop over 512-1024 lane chunks) to bound the live f32 h.


def mlp_kernel_ktiled(x_ref, w1_ref, b1_ref, w2_ref, b2_ref, o_ref, acc_ref):
    """K-tiled path: W1 streamed over a trailing 'arbitrary' D_in grid axis."""
    prec = jax.lax.Precision.HIGHEST if w1_ref.dtype == jnp.float32 else None
    k = pl.program_id(1)

    @pl.when(k == 0)
    def _():
        acc_ref[...] = jnp.zeros_like(acc_ref)

    x = x_ref[...]
    if x.dtype != w1_ref.dtype:
        x = x.astype(w1_ref.dtype)
    acc_ref[...] += jnp.dot(x, w1_ref[...],
                            preferred_element_type=jnp.float32, precision=prec)

    @pl.when(k == pl.num_programs(1) - 1)
    def _():
        h = jnp.maximum(acc_ref[...] + b1_ref[...], 0.0)
        y = jnp.dot(h.astype(w2_ref.dtype), w2_ref[...],
                    preferred_element_type=jnp.float32, precision=prec)
        o_ref[...] = (y + b2_ref[...]).astype(o_ref.dtype)


# ---------------------------------------------------------------------------
# Hardware introspection (best effort; conservative fallbacks)
# ---------------------------------------------------------------------------
def _vmem_capacity_bytes():
    try:
        info = pltpu.get_tpu_info()
        cap = getattr(info, "vmem_capacity_bytes", None)
        if cap:
            return int(cap)
    except Exception:
        pass
    return 64 * _MIB          # conservative: v7x has the smallest VMEM (64 MiB)


def _tensorcores_per_device():
    try:
        kind = (getattr(jax.devices()[0], "device_kind", "") or "").lower()
        if "v7" in kind:
            return 2          # v7x: 2 TensorCores per chip
    except Exception:
        pass
    return 1                  # v5e / v6e: single TensorCore


# ---------------------------------------------------------------------------
# Planning helpers
# ---------------------------------------------------------------------------
def _round_up(a, b):
    return ((a + b - 1) // b) * b


def _pick_tk(D_in, max_tk=2048):
    """Largest multiple of 128 (<= max_tk) that divides D_in exactly."""
    best = None
    t = 128
    while t <= min(max_tk, D_in):
        if D_in % t == 0:
            best = t
        t += 128
    return best


def _plan(N, D_in, H_p, D_out_p, x_itemsize, out_itemsize, w_itemsize,
          force_k_tiling=False, tk=None):
    cap = _vmem_capacity_bytes()
    budget = int(cap * 0.85)                 # never request above ~85% physical
    margin = 2 * _MIB                        # Mosaic internal scratch, sems
    n_cores = _tensorcores_per_device()

    # Fully-resident path footprint.
    resident_res = ((D_in * H_p + H_p * D_out_p) * w_itemsize
                    + (H_p + D_out_p) * 4)
    # Per-row bytes in the resident path: double-buffered x/out tiles plus
    # in-kernel bf16 copies and f32 intermediates.
    per_row_res = (2 * D_in * x_itemsize + 2 * D_out_p * out_itemsize
                   + D_in * w_itemsize + H_p * (4 + w_itemsize) + D_out_p * 4)

    use_k = bool(force_k_tiling)
    if not use_k and resident_res + margin + 64 * per_row_res > budget:
        use_k = True                         # weights don't fit comfortably
    if use_k:
        if tk is None:
            tk = _pick_tk(D_in)
        if tk is None or tk >= D_in:
            use_k, tk = False, None          # D_in not lane-tileable

    if use_k:
        resident = (H_p * D_out_p * w_itemsize + (H_p + D_out_p) * 4
                    + 2 * tk * H_p * w_itemsize)   # W2 + double-buffered W1 slab
        per_row = (2 * tk * x_itemsize + 2 * D_out_p * out_itemsize
                   + tk * w_itemsize + H_p * (8 + w_itemsize) + D_out_p * 4)
    else:
        resident = resident_res
        per_row = per_row_res

    avail = max(budget - margin - resident, 8 * per_row)
    tm = min(N, 1024, max(8, avail // per_row))
    if tm < N:
        tm = max(8, (tm // 8) * 8)

    # On a 2-TC chip keep an even number (>= 2) of batch steps so both cores
    # get equal work; on single-TC chips the grid is a serial loop, so the
    # largest tile that fits wins.
    if n_cores >= 2 and N > 8:
        steps = pl.cdiv(N, tm)
        if steps < 2 or steps % 2 == 1:
            steps = max(2, steps + (steps % 2))
            tm = max(8, min(tm, _round_up(pl.cdiv(N, steps), 8)))

    est_vmem = resident + per_row * int(tm) + margin
    vmem_limit = int(min(budget, max(32 * _MIB, est_vmem * 3 // 2)))
    return dict(tm=int(tm), tk=tk, use_k=use_k, n_cores=n_cores,
                vmem_limit=vmem_limit)


# ---------------------------------------------------------------------------
# One-time weight prep (hoisted out of the forward pass)
# ---------------------------------------------------------------------------
def prepare_params(w1, b1, w2, b2, compute_dtype=jnp.bfloat16):
    """Transpose torch nn.Linear (out,in) weights to (in,out), zero-pad lane
    dims, cast MXU operands once.  Biases stay f32 (elementwise math is f32
    everywhere, including v5e which has no bf16 VPU).  Pass
    compute_dtype=jnp.float32 for an f32-parity MXU path."""
    H, D_in = w1.shape
    D_out = w2.shape[0]

    H_p = _round_up(H, 128)
    # Only pad the output lane dim when it is already >= 128: padding e.g.
    # 16 -> 128 would multiply output HBM writes 8x, which costs more than
    # the masked partial stores it avoids.
    D_out_p = _round_up(D_out, 128) if D_out >= 128 else D_out

    w1_t = jnp.zeros((D_in, H_p), compute_dtype).at[:, :H].set(
        w1.T.astype(compute_dtype))
    b1_p = jnp.zeros((1, H_p), jnp.float32).at[:, :H].set(
        b1.astype(jnp.float32))
    w2_t = jnp.zeros((H_p, D_out_p), compute_dtype).at[:H, :D_out].set(
        w2.T.astype(compute_dtype))
    b2_p = jnp.zeros((1, D_out_p), jnp.float32).at[:, :D_out].set(
        b2.astype(jnp.float32))

    return dict(w1_t=w1_t, b1_p=b1_p, w2_t=w2_t, b2_p=b2_p,
                D_in=D_in, H=H, H_p=H_p, D_out=D_out, D_out_p=D_out_p,
                w_itemsize=jnp.dtype(compute_dtype).itemsize)


# ---------------------------------------------------------------------------
# Forward pass
# ---------------------------------------------------------------------------
_RESOURCE_HINTS = ("resource exhausted", "out of memory", "ran out", "exceeds")


def _call_with_fallback(build, variants, args):
    """Try preference-ordered build variants.  Resource errors (VMEM / OOM)
    are surfaced immediately instead of being masked by retrying a variant
    with a *larger* footprint; only feature-support failures fall through."""
    first_exc = None
    for idx, (batch_sem, single_buf) in enumerate(variants):
        try:
            return build(batch_sem, single_buf)(*args)
        except Exception as e:  # noqa: BLE001
            if idx == len(variants) - 1:
                raise
            msg = (str(e) or type(e).__name__).lower()
            if any(h in msg for h in _RESOURCE_HINTS):
                raise
            first_exc = first_exc or e
    raise first_exc


def two_layer_forward(x, params, *, tm=None, tk=None, force_k_tiling=False):
    """y = relu(x @ W1^T + b1) @ W2^T + b2 using prepared params."""
    N, D_in = x.shape
    assert D_in == params["D_in"], "x feature dim does not match prepared W1"
    w1_t, b1_p = params["w1_t"], params["b1_p"]
    w2_t, b2_p = params["w2_t"], params["b2_p"]
    H_p, D_out, D_out_p = params["H_p"], params["D_out"], params["D_out_p"]

    plan = _plan(N, D_in, H_p, D_out_p, x.dtype.itemsize, x.dtype.itemsize,
                 params["w_itemsize"], force_k_tiling=force_k_tiling, tk=tk)
    if tm is not None:
        plan["tm"] = int(tm)
    tm_, tk_, use_k = plan["tm"], plan["tk"], plan["use_k"]

    out_shape = jax.ShapeDtypeStruct((N, D_out_p), x.dtype)

    # Batch-axis semantics: core-parallel on 2-TC chips (v7x) so both
    # TensorCores get grid steps; plain "parallel" elsewhere.
    batch_sems = []
    if plan["n_cores"] >= 2 and pl.cdiv(N, tm_) >= 2:
        core_par = getattr(pltpu, "CORE_PARALLEL", None)
        if core_par is not None:
            batch_sems.append(core_par)
    batch_sems.append("parallel")

    def build(batch_sem, single_buffer_weights):
        resident = ({"pipeline_mode": pl.Buffered(buffer_count=1)}
                    if single_buffer_weights else {})
        arb = "arbitrary" if isinstance(batch_sem, str) else getattr(
            pltpu, "ARBITRARY", "arbitrary")
        cp_kwargs = dict(vmem_limit_bytes=plan["vmem_limit"])
        if use_k:
            grid = (pl.cdiv(N, tm_), D_in // tk_)
            grid_spec = pltpu.PrefetchScalarGridSpec(
                num_scalar_prefetch=0,
                grid=grid,
                in_specs=[
                    pl.BlockSpec((tm_, tk_), lambda i, k: (i, k)),        # x tile
                    pl.BlockSpec((tk_, H_p), lambda i, k: (k, 0)),        # W1^T K-slice (streamed)
                    pl.BlockSpec((1, H_p), lambda i, k: (0, 0), **resident),
                    pl.BlockSpec((H_p, D_out_p), lambda i, k: (0, 0), **resident),
                    pl.BlockSpec((1, D_out_p), lambda i, k: (0, 0), **resident),
                ],
                out_specs=pl.BlockSpec((tm_, D_out_p), lambda i, k: (i, 0)),
                scratch_shapes=[pltpu.VMEM((tm_, H_p), jnp.float32)],
            )
            kern = mlp_kernel_ktiled
            cp_kwargs["dimension_semantics"] = (batch_sem, arb)
        else:
            grid = (pl.cdiv(N, tm_),)
            grid_spec = pltpu.PrefetchScalarGridSpec(
                num_scalar_prefetch=0,
                grid=grid,
                in_specs=[
                    pl.BlockSpec((tm_, D_in), lambda i: (i, 0)),          # x tile (pipelined)
                    pl.BlockSpec((D_in, H_p), lambda i: (0, 0), **resident),
                    pl.BlockSpec((1, H_p), lambda i: (0, 0), **resident),
                    pl.BlockSpec((H_p, D_out_p), lambda i: (0, 0), **resident),
                    pl.BlockSpec((1, D_out_p), lambda i: (0, 0), **resident),
                ],
                out_specs=pl.BlockSpec((tm_, D_out_p), lambda i: (i, 0)),
            )
            kern = mlp_kernel
            cp_kwargs["dimension_semantics"] = (batch_sem,)
        return pl.pallas_call(
            kern,
            out_shape=out_shape,
            grid_spec=grid_spec,
            compiler_params=pltpu.CompilerParams(**cp_kwargs),
        )

    args = (x, w1_t, b1_p, w2_t, b2_p)
    variants = [(sem, True) for sem in batch_sems]
    variants.append((batch_sems[-1], False))     # double-buffered resident weights

    y_pad = _call_with_fallback(build, variants, args)
    return y_pad if D_out_p == D_out else y_pad[:, :D_out]


# ---------------------------------------------------------------------------
# Init (matches torch.nn.Linear default) + self-test
# ---------------------------------------------------------------------------
def init_params(key, D_in, H, D_out, dtype=jnp.float32):
    """torch.nn.Linear default init: U[-1/sqrt(fan_in), 1/sqrt(fan_in)]."""
    k1, k2, k3, k4 = jax.random.split(key, 4)
    bound1 = 1.0 / (D_in ** 0.5)
    bound2 = 1.0 / (H ** 0.5)
    w1 = jax.random.uniform(k1, (H, D_in), dtype, -bound1, bound1)
    b1 = jax.random.uniform(k2, (H,), dtype, -bound1, bound1)
    w2 = jax.random.uniform(k3, (D_out, H), dtype, -bound2, bound2)
    b2 = jax.random.uniform(k4, (D_out,), dtype, -bound2, bound2)
    return w1, b1, w2, b2


if __name__ == "__main__":
    key = jax.random.PRNGKey(0)
    kx, kp, kx2, kp2 = jax.random.split(key, 4)

    # --- Test 1: resident-weights path (bf16 MXU, f32 accumulate) ----------
    N, D_in, H, D_out = 256, 64, 128, 16
    x = jax.random.normal(kx, (N, D_in), dtype=jnp.float32)
    w1, b1, w2, b2 = init_params(kp, D_in, H, D_out)

    params = prepare_params(w1, b1, w2, b2)          # one-time weight prep
    y = jax.block_until_ready(two_layer_forward(x, params))

    y_ref = jnp.maximum(x @ w1.T + b1, 0.0) @ w2.T + b2
    assert y.shape == (N, D_out)
    assert jnp.allclose(y, y_ref, atol=5e-2, rtol=5e-2), (
        f"resident path: max abs err {float(jnp.max(jnp.abs(y - y_ref)))}")

    # --- Test 2: K-tiled path (W1 streamed over D_in, f32 acc scratch) -----
    N2, D_in2, H2, D_out2 = 64, 256, 64, 32
    x2 = jax.random.normal(kx2, (N2, D_in2), dtype=jnp.float32)
    w1b, b1b, w2b, b2b = init_params(kp2, D_in2, H2, D_out2)
    params2 = prepare_params(w1b, b1b, w2b, b2b)
    y2 = jax.block_until_ready(
        two_layer_forward(x2, params2, force_k_tiling=True, tk=128))

    y2_ref = jnp.maximum(x2 @ w1b.T + b1b, 0.0) @ w2b.T + b2b
    assert y2.shape == (N2, D_out2)
    assert jnp.allclose(y2, y2_ref, atol=5e-2, rtol=5e-2), (
        f"k-tiled path: max abs err {float(jnp.max(jnp.abs(y2 - y2_ref)))}")

    print("KERNEL_OK")
</pallas_src>

<mosaic_0001>
module attributes {stable_mosaic.version = 11 : i64} {
  func.func @mlp_kernel(%arg0: i32, %arg1: memref<256x64xf32, #tpu.memory_space<vmem>>, %arg2: memref<64x128xbf16, #tpu.memory_space<vmem>>, %arg3: memref<1x128xf32, #tpu.memory_space<vmem>>, %arg4: memref<128x16xbf16, #tpu.memory_space<vmem>>, %arg5: memref<1x16xf32, #tpu.memory_space<vmem>>, %arg6: memref<256x16xf32, #tpu.memory_space<vmem>>) attributes {dimension_semantics = [#tpu.dimension_semantics<parallel>], iteration_bounds = array<i64: 1>, scalar_prefetch = 0 : i64, scratch_operands = 0 : i64, tpu.core_type = #tpu.core_type<tc>, window_params = [{transform_indices = @transform_0, window_bounds = array<i64: 256, 64>}, {pipeline_mode = #tpu.pipeline_mode<synchronous>, transform_indices = @transform_1, window_bounds = array<i64: 64, 128>}, {pipeline_mode = #tpu.pipeline_mode<synchronous>, transform_indices = @transform_2, window_bounds = array<i64: 1, 128>}, {pipeline_mode = #tpu.pipeline_mode<synchronous>, transform_indices = @transform_3, window_bounds = array<i64: 128, 16>}, {pipeline_mode = #tpu.pipeline_mode<synchronous>, transform_indices = @transform_4, window_bounds = array<i64: 1, 16>}, {transform_indices = @transform_5, window_bounds = array<i64: 256, 16>}]} {
    %c0 = arith.constant 0 : index
    %c0_0 = arith.constant 0 : index
    %0 = vector.load %arg1[%c0, %c0_0] : memref<256x64xf32, #tpu.memory_space<vmem>>, vector<256x64xf32>
    %1 = arith.truncf %0 : vector<256x64xf32> to vector<256x64xbf16>
    %c0_1 = arith.constant 0 : index
    %c0_2 = arith.constant 0 : index
    %2 = vector.load %arg2[%c0_1, %c0_2] : memref<64x128xbf16, #tpu.memory_space<vmem>>, vector<64x128xbf16>
    %cst = arith.constant dense<0.000000e+00> : vector<256x128xf32>
    %3 = tpu.matmul %1, %2, %cst {dimension_numbers = #tpu.dot_dimension_numbers<[1], [0], [0], [1], [0, 0, 1, 1], [], []>} : vector<256x64xbf16>, vector<64x128xbf16>, vector<256x128xf32> -> vector<256x128xf32>
    %c0_3 = arith.constant 0 : index
    %c0_4 = arith.constant 0 : index
    %4 = vector.load %arg3[%c0_3, %c0_4] : memref<1x128xf32, #tpu.memory_space<vmem>>, vector<1x128xf32>
    %5 = vector.broadcast %4 : vector<1x128xf32> to vector<256x128xf32>
    %6 = arith.addf %3, %5 : vector<256x128xf32>
    %cst_5 = arith.constant 0.000000e+00 : f32
    %7 = vector.broadcast %cst_5 : f32 to vector<256x128xf32>
    %8 = arith.maximumf %6, %7 : vector<256x128xf32>
    %9 = arith.truncf %8 : vector<256x128xf32> to vector<256x128xbf16>
    %c0_6 = arith.constant 0 : index
    %c0_7 = arith.constant 0 : index
    %10 = vector.load %arg4[%c0_6, %c0_7] : memref<128x16xbf16, #tpu.memory_space<vmem>>, vector<128x16xbf16>
    %cst_8 = arith.constant dense<0.000000e+00> : vector<256x16xf32>
    %11 = tpu.matmul %9, %10, %cst_8 {dimension_numbers = #tpu.dot_dimension_numbers<[1], [0], [0], [1], [0, 0, 1, 1], [], []>} : vector<256x128xbf16>, vector<128x16xbf16>, vector<256x16xf32> -> vector<256x16xf32>
    %c0_9 = arith.constant 0 : index
    %c0_10 = arith.constant 0 : index
    %12 = vector.load %arg5[%c0_9, %c0_10] : memref<1x16xf32, #tpu.memory_space<vmem>>, vector<1x16xf32>
    %13 = vector.broadcast %12 : vector<1x16xf32> to vector<256x16xf32>
    %14 = arith.addf %11, %13 : vector<256x16xf32>
    %c0_11 = arith.constant 0 : index
    %c0_12 = arith.constant 0 : index
    %15 = vector.load %arg6[%c0_11, %c0_12] : memref<256x16xf32, #tpu.memory_space<vmem>>, vector<256x16xf32>
    tpu.vector_store %arg6[%c0_11, %c0_12], %14 {strides = array<i32>} : memref<256x16xf32, #tpu.memory_space<vmem>>, vector<256x16xf32>,
    return
  }
  func.func @transform_0(%arg0: i32) -> (i32, i32) {
    %c0_i32 = arith.constant 0 : i32
    %c0_i32_0 = arith.constant 0 : i32
    return %arg0, %c0_i32 : i32, i32
  }
  func.func @transform_1(%arg0: i32) -> (i32, i32) {
    %c0_i32 = arith.constant 0 : i32
    %c0_i32_0 = arith.constant 0 : i32
    %c0_i32_1 = arith.constant 0 : i32
    return %c0_i32, %c0_i32_0 : i32, i32
  }
  func.func @transform_2(%arg0: i32) -> (i32, i32) {
    %c0_i32 = arith.constant 0 : i32
    %c0_i32_0 = arith.constant 0 : i32
    %c0_i32_1 = arith.constant 0 : i32
    return %c0_i32, %c0_i32_0 : i32, i32
  }
  func.func @transform_3(%arg0: i32) -> (i32, i32) {
    %c0_i32 = arith.constant 0 : i32
    %c0_i32_0 = arith.constant 0 : i32
    %c0_i32_1 = arith.constant 0 : i32
    return %c0_i32, %c0_i32_0 : i32, i32
  }
  func.func @transform_4(%arg0: i32) -> (i32, i32) {
    %c0_i32 = arith.constant 0 : i32
    %c0_i32_0 = arith.constant 0 : i32
    %c0_i32_1 = arith.constant 0 : i32
    return %c0_i32, %c0_i32_0 : i32, i32
  }
  func.func @transform_5(%arg0: i32) -> (i32, i32) {
    %c0_i32 = arith.constant 0 : i32
    %c0_i32_0 = arith.constant 0 : i32
    return %arg0, %c0_i32 : i32, i32
  }
}

module attributes {stable_mosaic.version = 11 : i64} {
  func.func @mlp_kernel(%arg0: i32, %arg1: memref<256x64xf32, #tpu.memory_space<vmem>>, %arg2: memref<64x128xbf16, #tpu.memory_space<vmem>>, %arg3: memref<1x128xf32, #tpu.memory_space<vmem>>, %arg4: memref<128x16xbf16, #tpu.memory_space<vmem>>, %arg5: memref<1x16xf32, #tpu.memory_space<vmem>>, %arg6: memref<256x16xf32, #tpu.memory_space<vmem>>) attributes {dimension_semantics = [#tpu.dimension_semantics<parallel>], iteration_bounds = array<i64: 1>, scalar_prefetch = 0 : i64, scratch_operands = 0 : i64, tpu.core_type = #tpu.core_type<tc>, window_params = [{transform_indices = @transform_0, window_bounds = array<i64: 256, 64>}, {pipeline_mode = #tpu.pipeline_mode<synchronous>, transform_indices = @transform_1, window_bounds = array<i64: 64, 128>}, {pipeline_mode = #tpu.pipeline_mode<synchronous>, transform_indices = @transform_2, window_bounds = array<i64: 1, 128>}, {pipeline_mode = #tpu.pipeline_mode<synchronous>, transform_indices = @transform_3, window_bounds = array<i64: 128, 16>}, {pipeline_mode = #tpu.pipeline_mode<synchronous>, transform_indices = @transform_4, window_bounds = array<i64: 1, 16>}, {transform_indices = @transform_5, window_bounds = array<i64: 256, 16>}]} {
    %c0 = arith.constant 0 : index
    %c0_0 = arith.constant 0 : index
    %0 = vector.load %arg1[%c0, %c0_0] : memref<256x64xf32, #tpu.memory_space<vmem>>, vector<256x64xf32>
    %1 = arith.truncf %0 : vector<256x64xf32> to vector<256x64xbf16>
    %c0_1 = arith.constant 0 : index
    %c0_2 = arith.constant 0 : index
    %2 = vector.load %arg2[%c0_1, %c0_2] : memref<64x128xbf16, #tpu.memory_space<vmem>>, vector<64x128xbf16>
    %cst = arith.constant dense<0.000000e+00> : vector<256x128xf32>
    %3 = tpu.matmul %1, %2, %cst {dimension_numbers = #tpu.dot_dimension_numbers<[1], [0], [0], [1], [0, 0, 1, 1], [], []>} : vector<256x64xbf16>, vector<64x128xbf16>, vector<256x128xf32> -> vector<256x128xf32>
    %c0_3 = arith.constant 0 : index
    %c0_4 = arith.constant 0 : index
    %4 = vector.load %arg3[%c0_3, %c0_4] : memref<1x128xf32, #tpu.memory_space<vmem>>, vector<1x128xf32>
    %5 = vector.broadcast %4 : vector<1x128xf32> to vector<256x128xf32>
    %6 = arith.addf %3, %5 : vector<256x128xf32>
    %cst_5 = arith.constant 0.000000e+00 : f32
    %7 = vector.broadcast %cst_5 : f32 to vector<256x128xf32>
    %8 = arith.maximumf %6, %7 : vector<256x128xf32>
    %9 = arith.truncf %8 : vector<256x128xf32> to vector<256x128xbf16>
    %c0_6 = arith.constant 0 : index
    %c0_7 = arith.constant 0 : index
    %10 = vector.load %arg4[%c0_6, %c0_7] : memref<128x16xbf16, #tpu.memory_space<vmem>>, vector<128x16xbf16>
    %cst_8 = arith.constant dense<0.000000e+00> : vector<256x16xf32>
    %11 = tpu.matmul %9, %10, %cst_8 {dimension_numbers = #tpu.dot_dimension_numbers<[1], [0], [0], [1], [0, 0, 1, 1], [], []>} : vector<256x128xbf16>, vector<128x16xbf16>, vector<256x16xf32> -> vector<256x16xf32>
    %c0_9 = arith.constant 0 : index
    %c0_10 = arith.constant 0 : index
    %12 = vector.load %arg5[%c0_9, %c0_10] : memref<1x16xf32, #tpu.memory_space<vmem>>, vector<1x16xf32>
    %13 = vector.broadcast %12 : vector<1x16xf32> to vector<256x16xf32>
    %14 = arith.addf %11, %13 : vector<256x16xf32>
    %c0_11 = arith.constant 0 : index
    %c0_12 = arith.constant 0 : index
    %15 = vector.load %arg6[%c0_11, %c0_12] : memref<256x16xf32, #tpu.memory_space<vmem>>, vector<256x16xf32>
    tpu.vector_store %arg6[%c0_11, %c0_12], %14 {strides = array<i32>} : memref<256x16xf32, #tpu.memory_space<vmem>>, vector<256x16xf32>,
    return
  }
  func.func @transform_0(%arg0: i32) -> (i32, i32) {
    %c0_i32 = arith.constant 0 : i32
    %c0_i32_0 = arith.constant 0 : i32
    return %arg0, %c0_i32 : i32, i32
  }
  func.func @transform_1(%arg0: i32) -> (i32, i32) {
    %c0_i32 = arith.constant 0 : i32
    %c0_i32_0 = arith.constant 0 : i32
    %c0_i32_1 = arith.constant 0 : i32
    return %c0_i32, %c0_i32_0 : i32, i32
  }
  func.func @transform_2(%arg0: i32) -> (i32, i32) {
    %c0_i32 = arith.constant 0 : i32
    %c0_i32_0 = arith.constant 0 : i32
    %c0_i32_1 = arith.constant 0 : i32
    return %c0_i32, %c0_i32_0 : i32, i32
  }
  func.func @transform_3(%arg0: i32) -> (i32, i32) {
    %c0_i32 = arith.constant 0 : i32
    %c0_i32_0 = arith.constant 0 : i32
    %c0_i32_1 = arith.constant 0 : i32
    return %c0_i32, %c0_i32_0 : i32, i32
  }
  func.func @transform_4(%arg0: i32) -> (i32, i32) {
    %c0_i32 = arith.constant 0 : i32
    %c0_i32_0 = arith.constant 0 : i32
    %c0_i32_1 = arith.constant 0 : i32
    return %c0_i32, %c0_i32_0 : i32, i32
  }
  func.func @transform_5(%arg0: i32) -> (i32, i32) {
    %c0_i32 = arith.constant 0 : i32
    %c0_i32_0 = arith.constant 0 : i32
    return %arg0, %c0_i32 : i32, i32
  }
}

</mosaic_0001>

<llo_original>
// kernel: tpu_custom_call.1
$region0: #{tpu_custom_call.1}
  #allocation0 [shape = 'u32[]', space=smem, size = 0x4, offset = 0x4, fixed_abs, tag = 'smem constant byte address 0x4 - core index']
  #allocation1 [shape = 'u32[144,128]{1,0:T(1,128)}', space=vmem, size = 0x12000, scoped, tag = 'internal scratch']
  %s0 = inlined_call_operand.vmem [shape: f32[256,64], index: 0, kind: input, shape index: {}]
  %s1 = inlined_call_operand.vmem [shape: bf16[64,128], index: 1, kind: input, shape index: {}]
  %s2 = inlined_call_operand.vmem [shape: f32[1,128], index: 2, kind: input, shape index: {}]
  %s3 = inlined_call_operand.vmem [shape: bf16[128,16], index: 3, kind: input, shape index: {}]
  %s4 = inlined_call_operand.vmem [shape: f32[1,16], index: 4, kind: input, shape index: {}]
  %s5 = inlined_call_operand.vmem [shape: f32[256,16], index: 5, kind: output, shape index: {}]
  %s6 = sld [smem:[#allocation0]]
  $region30: #{tpu_custom_call.1} parent=0
    _
  %s8 = ssub.s32 1, %s6
  %s9 = scalar_select 0, %s8, %s6
  // Predicated region
  $region2: #{tpu_custom_call.1} parent=0 // pred_check
    _
  $region3: #{tpu_custom_call.1} parent=0 // pred_check_branch
    %11 = sbr.rel (0) target = $region5
  $region4: #{tpu_custom_call.1} parent=0 // pred_region
    _
  $region5: #{tpu_custom_call.1} parent=0 // pred_fallthru
    _
  // Predicated region
  $region6: #{tpu_custom_call.1} parent=0 // pred_check
    _
  $region7: #{tpu_custom_call.1} parent=0 // pred_check_branch
    %13 = sbr.rel (0) target = $region9
  $region8: #{tpu_custom_call.1} parent=0 // pred_region
    _
  $region9: #{tpu_custom_call.1} parent=0 // pred_fallthru
    _
  // Predicated region
  $region10: #{tpu_custom_call.1} parent=0 // pred_check
    _
  $region11: #{tpu_custom_call.1} parent=0 // pred_check_branch
    %15 = sbr.rel (0) target = $region13
  $region12: #{tpu_custom_call.1} parent=0 // pred_region
    _
  $region13: #{tpu_custom_call.1} parent=0 // pred_fallthru
    _
  // Predicated region
  $region14: #{tpu_custom_call.1} parent=0 // pred_check
    _
  $region15: #{tpu_custom_call.1} parent=0 // pred_check_branch
    %17 = sbr.rel (0) target = $region17
  $region16: #{tpu_custom_call.1} parent=0 // pred_region
    _
  $region17: #{tpu_custom_call.1} parent=0 // pred_fallthru
    _
  // Predicated region
  $region18: #{tpu_custom_call.1} parent=0 // pred_check
    _
  $region19: #{tpu_custom_call.1} parent=0 // pred_check_branch
    %19 = sbr.rel (0) target = $region21
  $region20: #{tpu_custom_call.1} parent=0 // pred_region
    _
  $region21: #{tpu_custom_call.1} parent=0 // pred_fallthru
    _
  %v21 = vld [vmem:[%s0] sm:$0xff]
  %v22 = vld [vmem:[%s0 + $0x8] sm:$0xff]
  %v23 = vld [vmem:[%s0 + $0x10] sm:$0xff]
  %v24 = vld [vmem:[%s0 + $0x18] sm:$0xff]
  %v25 = vld [vmem:[%s0 + $0x20] sm:$0xff]
  %v26 = vld [vmem:[%s0 + $0x28] sm:$0xff]
  %v27 = vld [vmem:[%s0 + $0x30] sm:$0xff]
  %v28 = vld [vmem:[%s0 + $0x38] sm:$0xff]
  %v29 = vld [vmem:[%s0 + $0x40] sm:$0xff]
  %v30 = vld [vmem:[%s0 + $0x48] sm:$0xff]
  %v31 = vld [vmem:[%s0 + $0x50] sm:$0xff]
  %v32 = vld [vmem:[%s0 + $0x58] sm:$0xff]
  %v33 = vld [vmem:[%s0 + $0x60] sm:$0xff]
  %v34 = vld [vmem:[%s0 + $0x68] sm:$0xff]
  %v35 = vld [vmem:[%s0 + $0x70] sm:$0xff]
  %v36 = vld [vmem:[%s0 + $0x78] sm:$0xff]
  %v37 = vld [vmem:[%s0 + $0x80] sm:$0xff]
  %v38 = vld [vmem:[%s0 + $0x88] sm:$0xff]
  %v39 = vld [vmem:[%s0 + $0x90] sm:$0xff]
  %v40 = vld [vmem:[%s0 + $0x98] sm:$0xff]
  %v41 = vld [vmem:[%s0 + $0xa0] sm:$0xff]
  %v42 = vld [vmem:[%s0 + $0xa8] sm:$0xff]
  %v43 = vld [vmem:[%s0 + $0xb0] sm:$0xff]
  %v44 = vld [vmem:[%s0 + $0xb8] sm:$0xff]
  %v45 = vld [vmem:[%s0 + $0xc0] sm:$0xff]
  %v46 = vld [vmem:[%s0 + $0xc8] sm:$0xff]
  %v47 = vld [vmem:[%s0 + $0xd0] sm:$0xff]
  %v48 = vld [vmem:[%s0 + $0xd8] sm:$0xff]
  %v49 = vld [vmem:[%s0 + $0xe0] sm:$0xff]
  %v50 = vld [vmem:[%s0 + $0xe8] sm:$0xff]
  %v51 = vld [vmem:[%s0 + $0xf0] sm:$0xff]
  %v52 = vld [vmem:[%s0 + $0xf8] sm:$0xff]
  %v53 = vpack.c.bf16 %v22, %v21
  %v54 = vpack.c.bf16 %v24, %v23
  %v55 = vpack.c.bf16 %v26, %v25
  %v56 = vpack.c.bf16 %v28, %v27
  %v57 = vpack.c.bf16 %v30, %v29
  %v58 = vpack.c.bf16 %v32, %v31
  %v59 = vpack.c.bf16 %v34, %v33
  %v60 = vpack.c.bf16 %v36, %v35
  %v61 = vpack.c.bf16 %v38, %v37
  %v62 = vpack.c.bf16 %v40, %v39
  %v63 = vpack.c.bf16 %v42, %v41
  %v64 = vpack.c.bf16 %v44, %v43
  %v65 = vpack.c.bf16 %v46, %v45
  %v66 = vpack.c.bf16 %v48, %v47
  %v67 = vpack.c.bf16 %v50, %v49
  %v68 = vpack.c.bf16 %v52, %v51
  %v69 = vld [vmem:[%s1] sm:$0xf]
  %v70 = vld [vmem:[%s1 + $0x4] sm:$0xf]
  %v71 = vld [vmem:[%s1 + $0x8] sm:$0xf]
  %v72 = vld [vmem:[%s1 + $0xc] sm:$0xf]
  %v73 = vld [vmem:[%s1 + $0x10] sm:$0xf]
  %v74 = vld [vmem:[%s1 + $0x14] sm:$0xf]
  %v75 = vld [vmem:[%s1 + $0x18] sm:$0xf]
  %v76 = vld [vmem:[%s1 + $0x1c] sm:$0xf]
  %v77 = vld [vmem:[%s2] sm:$0x1]
  %v79 = vlaneseq
  %v80 = vshrl.u32 %v79, 7
  %v81 = vsub.s32 0, %v80
  %v82 = vrot.slane %v77, %v81
  %v92 = vunpack.c.l.b16 %v69
  %v93 = vunpack.c.l.b16 %v70
  %v94 = vunpack.c.l.b16 %v71
  %v95 = vunpack.c.l.b16 %v72
  %v96 = vunpack.c.l.b16 %v73
  %v97 = vunpack.c.l.b16 %v74
  %v98 = vunpack.c.l.b16 %v75
  %v99 = vunpack.c.l.b16 %v76
  %v100 = vpack.c.b16 %v93, %v92
  %v101 = vpack.c.b16 %v95, %v94
  %v102 = vpack.c.b16 %v97, %v96
  %v103 = vpack.c.b16 %v99, %v98
  %vm108 = vcmask 523264
  %v110 = vsel %vm108, %v53, 0
  %v113 = vsel %vm108, %v54, 0
  %v116 = vsel %vm108, %v55, 0
  %v119 = vsel %vm108, %v56, 0
  %v122 = vsel %vm108, %v57, 0
  %v125 = vsel %vm108, %v58, 0
  %v128 = vsel %vm108, %v59, 0
  %v131 = vsel %vm108, %v60, 0
  %v134 = vsel %vm108, %v61, 0
  %v137 = vsel %vm108, %v62, 0
  %v140 = vsel %vm108, %v63, 0
  %v143 = vsel %vm108, %v64, 0
  %v146 = vsel %vm108, %v65, 0
  %v149 = vsel %vm108, %v66, 0
  %v152 = vsel %vm108, %v67, 0
  %v155 = vsel %vm108, %v68, 0
  %157 = vmatprep.subr.bf16.mxu0 0
  %158 = vmatpush1.bf16.msra.mxu0 0
  %159 = vmatprep.subr.bf16.mxu0 0
  %160 = vmatpush1.bf16.msra.mxu0 0
  %161 = vmatprep.subr.bf16.mxu0 0
  %162 = vmatpush1.bf16.msra.mxu0 0
  %163 = vmatprep.subr.bf16.mxu0 0
  %164 = vmatpush1.bf16.msra.mxu0 0
  %165 = vmatprep.subr.bf16.mxu0 0
  %166 = vmatpush1.bf16.msra.mxu0 %v103
  %167 = vmatprep.subr.bf16.mxu0 0
  %168 = vmatpush1.bf16.msra.mxu0 %v102
  %169 = vmatprep.subr.bf16.mxu0 0
  %170 = vmatpush1.bf16.msra.mxu0 %v101
  %171 = vmatprep.subr.bf16.mxu0 0
  %172 = vmatpush1.bf16.msra.mxu0 %v100
  %173 = vmatprep.subr.bf16.mxu0 0
  %174 = vmatpush2.bf16.msra.mxu0 0
  %175 = vmatprep.subr.bf16.mxu0 0
  %176 = vmatpush2.bf16.msra.mxu0 0
  %177 = vmatprep.subr.bf16.mxu0 0
  %178 = vmatpush2.bf16.msra.mxu0 0
  %179 = vmatprep.subr.bf16.mxu0 0
  %180 = vmatpush2.bf16.msra.mxu0 0
  %181 = vmatprep.subr.bf16.mxu0 0
  %182 = vmatpush2.bf16.msra.mxu0 0
  %183 = vmatprep.subr.bf16.mxu0 0
  %184 = vmatpush2.bf16.msra.mxu0 0
  %185 = vmatprep.subr.bf16.mxu0 0
  %186 = vmatpush2.bf16.msra.mxu0 0
  %187 = vmatprep.subr.bf16.mxu0 0
  %188 = vmatpush2.bf16.msra.mxu0 0
  %189 = vmatprep.mubr.bf16.mxu0 0
  %190 = vmatmul.mubr.bf16.gmra.mxu0 %v110
  %v191 = vpop.f32.mrf.mxu0
  %v192 = vadd.f32 %v82, %v191
  %v193 = vpop.f32.mrf.mxu0
  %v194 = vpop.f32.mrf.mxu0
  %v195 = vadd.f32 %v82, %v194
  %v196 = vpop.f32.mrf.mxu0
  %197 = vmatprep.mubr.bf16.mxu0 0
  %198 = vmatmul.mubr.bf16.gmra.mxu0 %v113
  %v199 = vpop.f32.mrf.mxu0
  %v200 = vadd.f32 %v82, %v199
  %v201 = vpop.f32.mrf.mxu0
  %v202 = vpop.f32.mrf.mxu0
  %v203 = vadd.f32 %v82, %v202
  %v204 = vpop.f32.mrf.mxu0
  %205 = vmatprep.mubr.bf16.mxu0 0
  %206 = vmatmul.mubr.bf16.gmra.mxu0 %v116
  %v207 = vpop.f32.mrf.mxu0
  %v208 = vadd.f32 %v82, %v207
  %v209 = vpop.f32.mrf.mxu0
  %v210 = vpop.f32.mrf.mxu0
  %v211 = vadd.f32 %v82, %v210
  %v212 = vpop.f32.mrf.mxu0
  %213 = vmatprep.mubr.bf16.mxu0 0
  %214 = vmatmul.mubr.bf16.gmra.mxu0 %v119
  %v215 = vpop.f32.mrf.mxu0
  %v216 = vadd.f32 %v82, %v215
  %v217 = vpop.f32.mrf.mxu0
  %v218 = vpop.f32.mrf.mxu0
  %v219 = vadd.f32 %v82, %v218
  %v220 = vpop.f32.mrf.mxu0
  %221 = vmatprep.mubr.bf16.mxu0 0
  %222 = vmatmul.mubr.bf16.gmra.mxu0 %v122
  %v223 = vpop.f32.mrf.mxu0
  %v224 = vadd.f32 %v82, %v223
  %v225 = vpop.f32.mrf.mxu0
  %v226 = vpop.f32.mrf.mxu0
  %v227 = vadd.f32 %v82, %v226
  %v228 = vpop.f32.mrf.mxu0
  %229 = vmatprep.mubr.bf16.mxu0 0
  %230 = vmatmul.mubr.bf16.gmra.mxu0 %v125
  %v231 = vpop.f32.mrf.mxu0
  %v232 = vadd.f32 %v82, %v231
  %v233 = vpop.f32.mrf.mxu0
  %v234 = vpop.f32.mrf.mxu0
  %v235 = vadd.f32 %v82, %v234
  %v236 = vpop.f32.mrf.mxu0
  %237 = vmatprep.mubr.bf16.mxu0 0
  %238 = vmatmul.mubr.bf16.gmra.mxu0 %v128
  %v239 = vpop.f32.mrf.mxu0
  %v240 = vadd.f32 %v82, %v239
  %v241 = vpop.f32.mrf.mxu0
  %v242 = vpop.f32.mrf.mxu0
  %v243 = vadd.f32 %v82, %v242
  %v244 = vpop.f32.mrf.mxu0
  %245 = vmatprep.mubr.bf16.mxu0 0
  %246 = vmatmul.mubr.bf16.gmra.mxu0 %v131
  %v247 = vpop.f32.mrf.mxu0
  %v248 = vadd.f32 %v82, %v247
  %v249 = vpop.f32.mrf.mxu0
  %v250 = vpop.f32.mrf.mxu0
  %v251 = vadd.f32 %v82, %v250
  %v252 = vpop.f32.mrf.mxu0
  %253 = vmatprep.mubr.bf16.mxu0 0
  %254 = vmatmul.mubr.bf16.gmra.mxu0 %v134
  %v255 = vpop.f32.mrf.mxu0
  %v256 = vadd.f32 %v82, %v255
  %v257 = vpop.f32.mrf.mxu0
  %v258 = vpop.f32.mrf.mxu0
  %v259 = vadd.f32 %v82, %v258
  %v260 = vpop.f32.mrf.mxu0
  %261 = vmatprep.mubr.bf16.mxu0 0
  %262 = vmatmul.mubr.bf16.gmra.mxu0 %v137
  %v263 = vpop.f32.mrf.mxu0
  %v264 = vadd.f32 %v82, %v263
  %v265 = vpop.f32.mrf.mxu0
  %v266 = vpop.f32.mrf.mxu0
  %v267 = vadd.f32 %v82, %v266
  %v268 = vpop.f32.mrf.mxu0
  %269 = vmatprep.mubr.bf16.mxu0 0
  %270 = vmatmul.mubr.bf16.gmra.mxu0 %v140
  %v271 = vpop.f32.mrf.mxu0
  %v272 = vadd.f32 %v82, %v271
  %v273 = vpop.f32.mrf.mxu0
  %v274 = vpop.f32.mrf.mxu0
  %v275 = vadd.f32 %v82, %v274
  %v276 = vpop.f32.mrf.mxu0
  %277 = vmatprep.mubr.bf16.mxu0 0
  %278 = vmatmul.mubr.bf16.gmra.mxu0 %v143
  %v279 = vpop.f32.mrf.mxu0
  %v280 = vadd.f32 %v82, %v279
  %v281 = vpop.f32.mrf.mxu0
  %v282 = vpop.f32.mrf.mxu0
  %v283 = vadd.f32 %v82, %v282
  %v284 = vpop.f32.mrf.mxu0
  %285 = vmatprep.mubr.bf16.mxu0 0
  %286 = vmatmul.mubr.bf16.gmra.mxu0 %v146
  %v287 = vpop.f32.mrf.mxu0
  %v288 = vadd.f32 %v82, %v287
  %v289 = vpop.f32.mrf.mxu0
  %v290 = vpop.f32.mrf.mxu0
  %v291 = vadd.f32 %v82, %v290
  %v292 = vpop.f32.mrf.mxu0
  %293 = vmatprep.mubr.bf16.mxu0 0
  %294 = vmatmul.mubr.bf16.gmra.mxu0 %v149
  %v295 = vpop.f32.mrf.mxu0
  %v296 = vadd.f32 %v82, %v295
  %v297 = vpop.f32.mrf.mxu0
  %v298 = vpop.f32.mrf.mxu0
  %v299 = vadd.f32 %v82, %v298
  %v300 = vpop.f32.mrf.mxu0
  %301 = vmatprep.mubr.bf16.mxu0 0
  %302 = vmatmul.mubr.bf16.gmra.mxu0 %v152
  %v303 = vpop.f32.mrf.mxu0
  %v304 = vadd.f32 %v82, %v303
  %v305 = vpop.f32.mrf.mxu0
  %v306 = vpop.f32.mrf.mxu0
  %v307 = vadd.f32 %v82, %v306
  %v308 = vpop.f32.mrf.mxu0
  %309 = vmatprep.mubr.bf16.mxu0 0
  %310 = vmatmul.mubr.bf16.gmra.mxu0 %v155
  %v311 = vpop.f32.mrf.mxu0
  %v312 = vadd.f32 %v82, %v311
  %v313 = vpop.f32.mrf.mxu0
  %v314 = vpop.f32.mrf.mxu0
  %v315 = vadd.f32 %v82, %v314
  %v316 = vpop.f32.mrf.mxu0
  %317 = vdwg.mxu0
  %v318 = vmax.f32 %v192, 0.0
  %v319 = vmax.f32 %v195, 0.0
  %v320 = vmax.f32 %v200, 0.0
  %v321 = vmax.f32 %v203, 0.0
  %v322 = vmax.f32 %v208, 0.0
  %v323 = vmax.f32 %v211, 0.0
  %v324 = vmax.f32 %v216, 0.0
  %v325 = vmax.f32 %v219, 0.0
  %v326 = vmax.f32 %v224, 0.0
  %v327 = vmax.f32 %v227, 0.0
  %v328 = vmax.f32 %v232, 0.0
  %v329 = vmax.f32 %v235, 0.0
  %v330 = vmax.f32 %v240, 0.0
  %v331 = vmax.f32 %v243, 0.0
  %v332 = vmax.f32 %v248, 0.0
  %v333 = vmax.f32 %v251, 0.0
  %v334 = vmax.f32 %v256, 0.0
  %v335 = vmax.f32 %v259, 0.0
  %v336 = vmax.f32 %v264, 0.0
  %v337 = vmax.f32 %v267, 0.0
  %v338 = vmax.f32 %v272, 0.0
  %v339 = vmax.f32 %v275, 0.0
  %v340 = vmax.f32 %v280, 0.0
  %v341 = vmax.f32 %v283, 0.0
  %v342 = vmax.f32 %v288, 0.0
  %v343 = vmax.f32 %v291, 0.0
  %v344 = vmax.f32 %v296, 0.0
  %v345 = vmax.f32 %v299, 0.0
  %v346 = vmax.f32 %v304, 0.0
  %v347 = vmax.f32 %v307, 0.0
  %v348 = vmax.f32 %v312, 0.0
  %v349 = vmax.f32 %v315, 0.0
  %v350 = vpack.c.bf16 %v319, %v318
  %v351 = vpack.c.bf16 %v321, %v320
  %v352 = vpack.c.bf16 %v323, %v322
  %v353 = vpack.c.bf16 %v325, %v324
  %v354 = vpack.c.bf16 %v327, %v326
  %v355 = vpack.c.bf16 %v329, %v328
  %v356 = vpack.c.bf16 %v331, %v330
  %v357 = vpack.c.bf16 %v333, %v332
  %v358 = vpack.c.bf16 %v335, %v334
  %v359 = vpack.c.bf16 %v337, %v336
  %v360 = vpack.c.bf16 %v339, %v338
  %v361 = vpack.c.bf16 %v341, %v340
  %v362 = vpack.c.bf16 %v343, %v342
  %v363 = vpack.c.bf16 %v345, %v344
  %v364 = vpack.c.bf16 %v347, %v346
  %v365 = vpack.c.bf16 %v349, %v348
  %v366 = vld [vmem:[%s3] sm:$0xf]
  %v367 = vld [vmem:[%s3 + $0x4] sm:$0xf]
  %v368 = vld [vmem:[%s3 + $0x8] sm:$0xf]
  %v369 = vld [vmem:[%s3 + $0xc] sm:$0xf]
  %v370 = vld [vmem:[%s3 + $0x10] sm:$0xf]
  %v371 = vld [vmem:[%s3 + $0x14] sm:$0xf]
  %v372 = vld [vmem:[%s3 + $0x18] sm:$0xf]
  %v373 = vld [vmem:[%s3 + $0x1c] sm:$0xf]
  %v374 = vld [vmem:[%s3 + $0x20] sm:$0xf]
  %v375 = vld [vmem:[%s3 + $0x24] sm:$0xf]
  %v376 = vld [vmem:[%s3 + $0x28] sm:$0xf]
  %v377 = vld [vmem:[%s3 + $0x2c] sm:$0xf]
  %v378 = vld [vmem:[%s3 + $0x30] sm:$0xf]
  %v379 = vld [vmem:[%s3 + $0x34] sm:$0xf]
  %v380 = vld [vmem:[%s3 + $0x38] sm:$0xf]
  %v381 = vld [vmem:[%s3 + $0x3c] sm:$0xf]
  %v382 = vld [vmem:[%s4] sm:$0x1]
  %v384 = vlaneseq
  %v385 = vshrl.u32 %v384, 7
  %v386 = vsub.s32 0, %v385
  %v387 = vrot.slane %v382, %v386
  %v405 = vunpack.c.l.b16 %v366
  %v406 = vunpack.c.l.b16 %v367
  %v407 = vunpack.c.l.b16 %v368
  %v408 = vunpack.c.l.b16 %v369
  %v409 = vunpack.c.l.b16 %v370
  %v410 = vunpack.c.l.b16 %v371
  %v411 = vunpack.c.l.b16 %v372
  %v412 = vunpack.c.l.b16 %v373
  %v413 = vunpack.c.l.b16 %v374
  %v414 = vunpack.c.l.b16 %v375
  %v415 = vunpack.c.l.b16 %v376
  %v416 = vunpack.c.l.b16 %v377
  %v417 = vunpack.c.l.b16 %v378
  %v418 = vunpack.c.l.b16 %v379
  %v419 = vunpack.c.l.b16 %v380
  %v420 = vunpack.c.l.b16 %v381
  %v421 = vpack.c.b16 %v406, %v405
  %v422 = vpack.c.b16 %v408, %v407
  %v423 = vpack.c.b16 %v410, %v409
  %v424 = vpack.c.b16 %v412, %v411
  %v425 = vpack.c.b16 %v414, %v413
  %v426 = vpack.c.b16 %v416, %v415
  %v427 = vpack.c.b16 %v418, %v417
  %v428 = vpack.c.b16 %v420, %v419
  %437 = vmatprep.subr.bf16.mxu0 0
  %438 = vmatpush1.bf16.msra.mxu0 %v428
  %439 = vmatprep.subr.bf16.mxu0 0
  %440 = vmatpush1.bf16.msra.mxu0 %v427
  %441 = vmatprep.subr.bf16.mxu0 0
  %442 = vmatpush1.bf16.msra.mxu0 %v426
  %443 = vmatprep.subr.bf16.mxu0 0
  %444 = vmatpush1.bf16.msra.mxu0 %v425
  %445 = vmatprep.subr.bf16.mxu0 0
  %446 = vmatpush1.bf16.msra.mxu0 %v424
  %447 = vmatprep.subr.bf16.mxu0 0
  %448 = vmatpush1.bf16.msra.mxu0 %v423
  %449 = vmatprep.subr.bf16.mxu0 0
  %450 = vmatpush1.bf16.msra.mxu0 %v422
  %451 = vmatprep.subr.bf16.mxu0 0
  %452 = vmatpush1.bf16.msra.mxu0 %v421
  %453 = vmatprep.subr.bf16.mxu0 0
  %454 = vmatpush2.bf16.msra.mxu0 0
  %455 = vmatprep.subr.bf16.mxu0 0
  %456 = vmatpush2.bf16.msra.mxu0 0
  %457 = vmatprep.subr.bf16.mxu0 0
  %458 = vmatpush2.bf16.msra.mxu0 0
  %459 = vmatprep.subr.bf16.mxu0 0
  %460 = vmatpush2.bf16.msra.mxu0 0
  %461 = vmatprep.subr.bf16.mxu0 0
  %462 = vmatpush2.bf16.msra.mxu0 0
  %463 = vmatprep.subr.bf16.mxu0 0
  %464 = vmatpush2.bf16.msra.mxu0 0
  %465 = vmatprep.subr.bf16.mxu0 0
  %466 = vmatpush2.bf16.msra.mxu0 0
  %467 = vmatprep.subr.bf16.mxu0 0
  %468 = vmatpush2.bf16.msra.mxu0 0
  %469 = vmatprep.mubr.bf16.mxu0 0
  %470 = vmatmul.mubr.bf16.gmra.mxu0 %v350
  %v471 = vpop.f32.mrf.mxu0
  %v472 = vadd.f32 %v387, %v471
  %v473 = vpop.f32.mrf.mxu0
  %v474 = vpop.f32.mrf.mxu0
  %v475 = vadd.f32 %v387, %v474
  %v476 = vpop.f32.mrf.mxu0
  %477 = vmatprep.mubr.bf16.mxu0 0
  %478 = vmatmul.mubr.bf16.gmra.mxu0 %v351
  %v479 = vpop.f32.mrf.mxu0
  %v480 = vadd.f32 %v387, %v479
  %v481 = vpop.f32.mrf.mxu0
  %v482 = vpop.f32.mrf.mxu0
  %v483 = vadd.f32 %v387, %v482
  %v484 = vpop.f32.mrf.mxu0
  %485 = vmatprep.mubr.bf16.mxu0 0
  %486 = vmatmul.mubr.bf16.gmra.mxu0 %v352
  %v487 = vpop.f32.mrf.mxu0
  %v488 = vadd.f32 %v387, %v487
  %v489 = vpop.f32.mrf.mxu0
  %v490 = vpop.f32.mrf.mxu0
  %v491 = vadd.f32 %v387, %v490
  %v492 = vpop.f32.mrf.mxu0
  %493 = vmatprep.mubr.bf16.mxu0 0
  %494 = vmatmul.mubr.bf16.gmra.mxu0 %v353
  %v495 = vpop.f32.mrf.mxu0
  %v496 = vadd.f32 %v387, %v495
  %v497 = vpop.f32.mrf.mxu0
  %v498 = vpop.f32.mrf.mxu0
  %v499 = vadd.f32 %v387, %v498
  %v500 = vpop.f32.mrf.mxu0
  %501 = vmatprep.mubr.bf16.mxu0 0
  %502 = vmatmul.mubr.bf16.gmra.mxu0 %v354
  %v503 = vpop.f32.mrf.mxu0
  %v504 = vadd.f32 %v387, %v503
  %v505 = vpop.f32.mrf.mxu0
  %v506 = vpop.f32.mrf.mxu0
  %v507 = vadd.f32 %v387, %v506
  %v508 = vpop.f32.mrf.mxu0
  %509 = vmatprep.mubr.bf16.mxu0 0
  %510 = vmatmul.mubr.bf16.gmra.mxu0 %v355
  %v511 = vpop.f32.mrf.mxu0
  %v512 = vadd.f32 %v387, %v511
  %v513 = vpop.f32.mrf.mxu0
  %v514 = vpop.f32.mrf.mxu0
  %v515 = vadd.f32 %v387, %v514
  %v516 = vpop.f32.mrf.mxu0
  %517 = vmatprep.mubr.bf16.mxu0 0
  %518 = vmatmul.mubr.bf16.gmra.mxu0 %v356
  %v519 = vpop.f32.mrf.mxu0
  %v520 = vadd.f32 %v387, %v519
  %v521 = vpop.f32.mrf.mxu0
  %v522 = vpop.f32.mrf.mxu0
  %v523 = vadd.f32 %v387, %v522
  %v524 = vpop.f32.mrf.mxu0
  %525 = vmatprep.mubr.bf16.mxu0 0
  %526 = vmatmul.mubr.bf16.gmra.mxu0 %v357
  %v527 = vpop.f32.mrf.mxu0
  %v528 = vadd.f32 %v387, %v527
  %v529 = vpop.f32.mrf.mxu0
  %v530 = vpop.f32.mrf.mxu0
  %v531 = vadd.f32 %v387, %v530
  %v532 = vpop.f32.mrf.mxu0
  %533 = vmatprep.mubr.bf16.mxu0 0
  %534 = vmatmul.mubr.bf16.gmra.mxu0 %v358
  %v535 = vpop.f32.mrf.mxu0
  %v536 = vadd.f32 %v387, %v535
  %v537 = vpop.f32.mrf.mxu0
  %v538 = vpop.f32.mrf.mxu0
  %v539 = vadd.f32 %v387, %v538
  %v540 = vpop.f32.mrf.mxu0
  %541 = vmatprep.mubr.bf16.mxu0 0
  %542 = vmatmul.mubr.bf16.gmra.mxu0 %v359
  %v543 = vpop.f32.mrf.mxu0
  %v544 = vadd.f32 %v387, %v543
  %v545 = vpop.f32.mrf.mxu0
  %v546 = vpop.f32.mrf.mxu0
  %v547 = vadd.f32 %v387, %v546
  %v548 = vpop.f32.mrf.mxu0
  %549 = vmatprep.mubr.bf16.mxu0 0
  %550 = vmatmul.mubr.bf16.gmra.mxu0 %v360
  %v551 = vpop.f32.mrf.mxu0
  %v552 = vadd.f32 %v387, %v551
  %v553 = vpop.f32.mrf.mxu0
  %v554 = vpop.f32.mrf.mxu0
  %v555 = vadd.f32 %v387, %v554
  %v556 = vpop.f32.mrf.mxu0
  %557 = vmatprep.mubr.bf16.mxu0 0
  %558 = vmatmul.mubr.bf16.gmra.mxu0 %v361
  %v559 = vpop.f32.mrf.mxu0
  %v560 = vadd.f32 %v387, %v559
  %v561 = vpop.f32.mrf.mxu0
  %v562 = vpop.f32.mrf.mxu0
  %v563 = vadd.f32 %v387, %v562
  %v564 = vpop.f32.mrf.mxu0
  %565 = vmatprep.mubr.bf16.mxu0 0
  %566 = vmatmul.mubr.bf16.gmra.mxu0 %v362
  %v567 = vpop.f32.mrf.mxu0
  %v568 = vadd.f32 %v387, %v567
  %v569 = vpop.f32.mrf.mxu0
  %v570 = vpop.f32.mrf.mxu0
  %v571 = vadd.f32 %v387, %v570
  %v572 = vpop.f32.mrf.mxu0
  %573 = vmatprep.mubr.bf16.mxu0 0
  %574 = vmatmul.mubr.bf16.gmra.mxu0 %v363
  %v575 = vpop.f32.mrf.mxu0
  %v576 = vadd.f32 %v387, %v575
  %v577 = vpop.f32.mrf.mxu0
  %v578 = vpop.f32.mrf.mxu0
  %v579 = vadd.f32 %v387, %v578
  %v580 = vpop.f32.mrf.mxu0
  %581 = vmatprep.mubr.bf16.mxu0 0
  %582 = vmatmul.mubr.bf16.gmra.mxu0 %v364
  %v583 = vpop.f32.mrf.mxu0
  %v584 = vadd.f32 %v387, %v583
  %v585 = vpop.f32.mrf.mxu0
  %v586 = vpop.f32.mrf.mxu0
  %v587 = vadd.f32 %v387, %v586
  %v588 = vpop.f32.mrf.mxu0
  %589 = vmatprep.mubr.bf16.mxu0 0
  %590 = vmatmul.mubr.bf16.gmra.mxu0 %v365
  %v591 = vpop.f32.mrf.mxu0
  %v592 = vadd.f32 %v387, %v591
  %v593 = vpop.f32.mrf.mxu0
  %v594 = vpop.f32.mrf.mxu0
  %v595 = vadd.f32 %v387, %v594
  %v596 = vpop.f32.mrf.mxu0
  %597 = vdwg.mxu0
  %vm598 = vcmask 130048
  %599 = vst.msk [vmem:[%s5] sm:$0xff] %vm598, %v472
  %600 = vst.msk [vmem:[%s5 + $0x8] sm:$0xff] %vm598, %v475
  %601 = vst.msk [vmem:[%s5 + $0x10] sm:$0xff] %vm598, %v480
  %602 = vst.msk [vmem:[%s5 + $0x18] sm:$0xff] %vm598, %v483
  %603 = vst.msk [vmem:[%s5 + $0x20] sm:$0xff] %vm598, %v488
  %604 = vst.msk [vmem:[%s5 + $0x28] sm:$0xff] %vm598, %v491
  %605 = vst.msk [vmem:[%s5 + $0x30] sm:$0xff] %vm598, %v496
  %606 = vst.msk [vmem:[%s5 + $0x38] sm:$0xff] %vm598, %v499
  %607 = vst.msk [vmem:[%s5 + $0x40] sm:$0xff] %vm598, %v504
  %608 = vst.msk [vmem:[%s5 + $0x48] sm:$0xff] %vm598, %v507
  %609 = vst.msk [vmem:[%s5 + $0x50] sm:$0xff] %vm598, %v512
  %610 = vst.msk [vmem:[%s5 + $0x58] sm:$0xff] %vm598, %v515
  %611 = vst.msk [vmem:[%s5 + $0x60] sm:$0xff] %vm598, %v520
  %612 = vst.msk [vmem:[%s5 + $0x68] sm:$0xff] %vm598, %v523
  %613 = vst.msk [vmem:[%s5 + $0x70] sm:$0xff] %vm598, %v528
  %614 = vst.msk [vmem:[%s5 + $0x78] sm:$0xff] %vm598, %v531
  %615 = vst.msk [vmem:[%s5 + $0x80] sm:$0xff] %vm598, %v536
  %616 = vst.msk [vmem:[%s5 + $0x88] sm:$0xff] %vm598, %v539
  %617 = vst.msk [vmem:[%s5 + $0x90] sm:$0xff] %vm598, %v544
  %618 = vst.msk [vmem:[%s5 + $0x98] sm:$0xff] %vm598, %v547
  %619 = vst.msk [vmem:[%s5 + $0xa0] sm:$0xff] %vm598, %v552
  %620 = vst.msk [vmem:[%s5 + $0xa8] sm:$0xff] %vm598, %v555
  %621 = vst.msk [vmem:[%s5 + $0xb0] sm:$0xff] %vm598, %v560
  %622 = vst.msk [vmem:[%s5 + $0xb8] sm:$0xff] %vm598, %v563
  %623 = vst.msk [vmem:[%s5 + $0xc0] sm:$0xff] %vm598, %v568
  %624 = vst.msk [vmem:[%s5 + $0xc8] sm:$0xff] %vm598, %v571
  %625 = vst.msk [vmem:[%s5 + $0xd0] sm:$0xff] %vm598, %v576
  %626 = vst.msk [vmem:[%s5 + $0xd8] sm:$0xff] %vm598, %v579
  %627 = vst.msk [vmem:[%s5 + $0xe0] sm:$0xff] %vm598, %v584
  %628 = vst.msk [vmem:[%s5 + $0xe8] sm:$0xff] %vm598, %v587
  %629 = vst.msk [vmem:[%s5 + $0xf0] sm:$0xff] %vm598, %v592
  %630 = vst.msk [vmem:[%s5 + $0xf8] sm:$0xff] %vm598, %v595
  // Predicated region
  $region22: #{tpu_custom_call.1} parent=0 // pred_check
    _
  $region23: #{tpu_custom_call.1} parent=0 // pred_check_branch
    %632 = sbr.rel (0) target = $region25
  $region24: #{tpu_custom_call.1} parent=0 // pred_region
    _
  $region25: #{tpu_custom_call.1} parent=0 // pred_fallthru
    _
  // Predicated region
  $region26: #{tpu_custom_call.1} parent=0 // pred_check
    _
  $region27: #{tpu_custom_call.1} parent=0 // pred_check_branch
    %634 = sbr.rel (0) target = $region29
  $region28: #{tpu_custom_call.1} parent=0 // pred_region
    _
  $region29: #{tpu_custom_call.1} parent=0 // pred_fallthru
    _

// kernel: tpu_custom_call.1
$region0: #{tpu_custom_call.1}
  #allocation0 [shape = 'u32[]', space=smem, size = 0x4, offset = 0x4, fixed_abs, tag = 'smem constant byte address 0x4 - core index']
  #allocation1 [shape = 'u32[144,128]{1,0:T(1,128)}', space=vmem, size = 0x12000, scoped, tag = 'internal scratch']
  %s0 = inlined_call_operand.vmem [shape: f32[256,64], index: 0, kind: input, shape index: {}]
  %s1 = inlined_call_operand.vmem [shape: bf16[64,128], index: 1, kind: input, shape index: {}]
  %s2 = inlined_call_operand.vmem [shape: f32[1,128], index: 2, kind: input, shape index: {}]
  %s3 = inlined_call_operand.vmem [shape: bf16[128,16], index: 3, kind: input, shape index: {}]
  %s4 = inlined_call_operand.vmem [shape: f32[1,16], index: 4, kind: input, shape index: {}]
  %s5 = inlined_call_operand.vmem [shape: f32[256,16], index: 5, kind: output, shape index: {}]
  %s6 = sld [smem:[#allocation0]]
  $region30: #{tpu_custom_call.1} parent=0
    _
  %s8 = ssub.s32 1, %s6
  %s9 = scalar_select 0, %s8, %s6
  // Predicated region
  $region2: #{tpu_custom_call.1} parent=0 // pred_check
    _
  $region3: #{tpu_custom_call.1} parent=0 // pred_check_branch
    %11 = sbr.rel (0) target = $region5
  $region4: #{tpu_custom_call.1} parent=0 // pred_region
    _
  $region5: #{tpu_custom_call.1} parent=0 // pred_fallthru
    _
  // Predicated region
  $region6: #{tpu_custom_call.1} parent=0 // pred_check
    _
  $region7: #{tpu_custom_call.1} parent=0 // pred_check_branch
    %13 = sbr.rel (0) target = $region9
  $region8: #{tpu_custom_call.1} parent=0 // pred_region
    _
  $region9: #{tpu_custom_call.1} parent=0 // pred_fallthru
    _
  // Predicated region
  $region10: #{tpu_custom_call.1} parent=0 // pred_check
    _
  $region11: #{tpu_custom_call.1} parent=0 // pred_check_branch
    %15 = sbr.rel (0) target = $region13
  $region12: #{tpu_custom_call.1} parent=0 // pred_region
    _
  $region13: #{tpu_custom_call.1} parent=0 // pred_fallthru
    _
  // Predicated region
  $region14: #{tpu_custom_call.1} parent=0 // pred_check
    _
  $region15: #{tpu_custom_call.1} parent=0 // pred_check_branch
    %17 = sbr.rel (0) target = $region17
  $region16: #{tpu_custom_call.1} parent=0 // pred_region
    _
  $region17: #{tpu_custom_call.1} parent=0 // pred_fallthru
    _
  // Predicated region
  $region18: #{tpu_custom_call.1} parent=0 // pred_check
    _
  $region19: #{tpu_custom_call.1} parent=0 // pred_check_branch
    %19 = sbr.rel (0) target = $region21
  $region20: #{tpu_custom_call.1} parent=0 // pred_region
    _
  $region21: #{tpu_custom_call.1} parent=0 // pred_fallthru
    _
  %v21 = vld [vmem:[%s0] sm:$0xff]
  %v22 = vld [vmem:[%s0 + $0x8] sm:$0xff]
  %v23 = vld [vmem:[%s0 + $0x10] sm:$0xff]
  %v24 = vld [vmem:[%s0 + $0x18] sm:$0xff]
  %v25 = vld [vmem:[%s0 + $0x20] sm:$0xff]
  %v26 = vld [vmem:[%s0 + $0x28] sm:$0xff]
  %v27 = vld [vmem:[%s0 + $0x30] sm:$0xff]
  %v28 = vld [vmem:[%s0 + $0x38] sm:$0xff]
  %v29 = vld [vmem:[%s0 + $0x40] sm:$0xff]
  %v30 = vld [vmem:[%s0 + $0x48] sm:$0xff]
  %v31 = vld [vmem:[%s0 + $0x50] sm:$0xff]
  %v32 = vld [vmem:[%s0 + $0x58] sm:$0xff]
  %v33 = vld [vmem:[%s0 + $0x60] sm:$0xff]
  %v34 = vld [vmem:[%s0 + $0x68] sm:$0xff]
  %v35 = vld [vmem:[%s0 + $0x70] sm:$0xff]
  %v36 = vld [vmem:[%s0 + $0x78] sm:$0xff]
  %v37 = vld [vmem:[%s0 + $0x80] sm:$0xff]
  %v38 = vld [vmem:[%s0 + $0x88] sm:$0xff]
  %v39 = vld [vmem:[%s0 + $0x90] sm:$0xff]
  %v40 = vld [vmem:[%s0 + $0x98] sm:$0xff]
  %v41 = vld [vmem:[%s0 + $0xa0] sm:$0xff]
  %v42 = vld [vmem:[%s0 + $0xa8] sm:$0xff]
  %v43 = vld [vmem:[%s0 + $0xb0] sm:$0xff]
  %v44 = vld [vmem:[%s0 + $0xb8] sm:$0xff]
  %v45 = vld [vmem:[%s0 + $0xc0] sm:$0xff]
  %v46 = vld [vmem:[%s0 + $0xc8] sm:$0xff]
  %v47 = vld [vmem:[%s0 + $0xd0] sm:$0xff]
  %v48 = vld [vmem:[%s0 + $0xd8] sm:$0xff]
  %v49 = vld [vmem:[%s0 + $0xe0] sm:$0xff]
  %v50 = vld [vmem:[%s0 + $0xe8] sm:$0xff]
  %v51 = vld [vmem:[%s0 + $0xf0] sm:$0xff]
  %v52 = vld [vmem:[%s0 + $0xf8] sm:$0xff]
  %v53 = vpack.c.bf16 %v22, %v21
  %v54 = vpack.c.bf16 %v24, %v23
  %v55 = vpack.c.bf16 %v26, %v25
  %v56 = vpack.c.bf16 %v28, %v27
  %v57 = vpack.c.bf16 %v30, %v29
  %v58 = vpack.c.bf16 %v32, %v31
  %v59 = vpack.c.bf16 %v34, %v33
  %v60 = vpack.c.bf16 %v36, %v35
  %v61 = vpack.c.bf16 %v38, %v37
  %v62 = vpack.c.bf16 %v40, %v39
  %v63 = vpack.c.bf16 %v42, %v41
  %v64 = vpack.c.bf16 %v44, %v43
  %v65 = vpack.c.bf16 %v46, %v45
  %v66 = vpack.c.bf16 %v48, %v47
  %v67 = vpack.c.bf16 %v50, %v49
  %v68 = vpack.c.bf16 %v52, %v51
  %v69 = vld [vmem:[%s1] sm:$0xf]
  %v70 = vld [vmem:[%s1 + $0x4] sm:$0xf]
  %v71 = vld [vmem:[%s1 + $0x8] sm:$0xf]
  %v72 = vld [vmem:[%s1 + $0xc] sm:$0xf]
  %v73 = vld [vmem:[%s1 + $0x10] sm:$0xf]
  %v74 = vld [vmem:[%s1 + $0x14] sm:$0xf]
  %v75 = vld [vmem:[%s1 + $0x18] sm:$0xf]
  %v76 = vld [vmem:[%s1 + $0x1c] sm:$0xf]
  %v77 = vld [vmem:[%s2] sm:$0x1]
  %v79 = vlaneseq
  %v80 = vshrl.u32 %v79, 7
  %v81 = vsub.s32 0, %v80
  %v82 = vrot.slane %v77, %v81
  %v92 = vunpack.c.l.b16 %v69
  %v93 = vunpack.c.l.b16 %v70
  %v94 = vunpack.c.l.b16 %v71
  %v95 = vunpack.c.l.b16 %v72
  %v96 = vunpack.c.l.b16 %v73
  %v97 = vunpack.c.l.b16 %v74
  %v98 = vunpack.c.l.b16 %v75
  %v99 = vunpack.c.l.b16 %v76
  %v100 = vpack.c.b16 %v93, %v92
  %v101 = vpack.c.b16 %v95, %v94
  %v102 = vpack.c.b16 %v97, %v96
  %v103 = vpack.c.b16 %v99, %v98
  %vm108 = vcmask 523264
  %v110 = vsel %vm108, %v53, 0
  %v113 = vsel %vm108, %v54, 0
  %v116 = vsel %vm108, %v55, 0
  %v119 = vsel %vm108, %v56, 0
  %v122 = vsel %vm108, %v57, 0
  %v125 = vsel %vm108, %v58, 0
  %v128 = vsel %vm108, %v59, 0
  %v131 = vsel %vm108, %v60, 0
  %v134 = vsel %vm108, %v61, 0
  %v137 = vsel %vm108, %v62, 0
  %v140 = vsel %vm108, %v63, 0
  %v143 = vsel %vm108, %v64, 0
  %v146 = vsel %vm108, %v65, 0
  %v149 = vsel %vm108, %v66, 0
  %v152 = vsel %vm108, %v67, 0
  %v155 = vsel %vm108, %v68, 0
  %157 = vmatprep.subr.bf16.mxu0 0
  %158 = vmatpush1.bf16.msra.mxu0 0
  %159 = vmatprep.subr.bf16.mxu0 0
  %160 = vmatpush1.bf16.msra.mxu0 0
  %161 = vmatprep.subr.bf16.mxu0 0
  %162 = vmatpush1.bf16.msra.mxu0 0
  %163 = vmatprep.subr.bf16.mxu0 0
  %164 = vmatpush1.bf16.msra.mxu0 0
  %165 = vmatprep.subr.bf16.mxu0 0
  %166 = vmatpush1.bf16.msra.mxu0 %v103
  %167 = vmatprep.subr.bf16.mxu0 0
  %168 = vmatpush1.bf16.msra.mxu0 %v102
  %169 = vmatprep.subr.bf16.mxu0 0
  %170 = vmatpush1.bf16.msra.mxu0 %v101
  %171 = vmatprep.subr.bf16.mxu0 0
  %172 = vmatpush1.bf16.msra.mxu0 %v100
  %173 = vmatprep.subr.bf16.mxu0 0
  %174 = vmatpush2.bf16.msra.mxu0 0
  %175 = vmatprep.subr.bf16.mxu0 0
  %176 = vmatpush2.bf16.msra.mxu0 0
  %177 = vmatprep.subr.bf16.mxu0 0
  %178 = vmatpush2.bf16.msra.mxu0 0
  %179 = vmatprep.subr.bf16.mxu0 0
  %180 = vmatpush2.bf16.msra.mxu0 0
  %181 = vmatprep.subr.bf16.mxu0 0
  %182 = vmatpush2.bf16.msra.mxu0 0
  %183 = vmatprep.subr.bf16.mxu0 0
  %184 = vmatpush2.bf16.msra.mxu0 0
  %185 = vmatprep.subr.bf16.mxu0 0
  %186 = vmatpush2.bf16.msra.mxu0 0
  %187 = vmatprep.subr.bf16.mxu0 0
  %188 = vmatpush2.bf16.msra.mxu0 0
  %189 = vmatprep.mubr.bf16.mxu0 0
  %190 = vmatmul.mubr.bf16.gmra.mxu0 %v110
  %v191 = vpop.f32.mrf.mxu0
  %v192 = vadd.f32 %v82, %v191
  %v193 = vpop.f32.mrf.mxu0
  %v194 = vpop.f32.mrf.mxu0
  %v195 = vadd.f32 %v82, %v194
  %v196 = vpop.f32.mrf.mxu0
  %197 = vmatprep.mubr.bf16.mxu0 0
  %198 = vmatmul.mubr.bf16.gmra.mxu0 %v113
  %v199 = vpop.f32.mrf.mxu0
  %v200 = vadd.f32 %v82, %v199
  %v201 = vpop.f32.mrf.mxu0
  %v202 = vpop.f32.mrf.mxu0
  %v203 = vadd.f32 %v82, %v202
  %v204 = vpop.f32.mrf.mxu0
  %205 = vmatprep.mubr.bf16.mxu0 0
  %206 = vmatmul.mubr.bf16.gmra.mxu0 %v116
  %v207 = vpop.f32.mrf.mxu0
  %v208 = vadd.f32 %v82, %v207
  %v209 = vpop.f32.mrf.mxu0
  %v210 = vpop.f32.mrf.mxu0
  %v211 = vadd.f32 %v82, %v210
  %v212 = vpop.f32.mrf.mxu0
  %213 = vmatprep.mubr.bf16.mxu0 0
  %214 = vmatmul.mubr.bf16.gmra.mxu0 %v119
  %v215 = vpop.f32.mrf.mxu0
  %v216 = vadd.f32 %v82, %v215
  %v217 = vpop.f32.mrf.mxu0
  %v218 = vpop.f32.mrf.mxu0
  %v219 = vadd.f32 %v82, %v218
  %v220 = vpop.f32.mrf.mxu0
  %221 = vmatprep.mubr.bf16.mxu0 0
  %222 = vmatmul.mubr.bf16.gmra.mxu0 %v122
  %v223 = vpop.f32.mrf.mxu0
  %v224 = vadd.f32 %v82, %v223
  %v225 = vpop.f32.mrf.mxu0
  %v226 = vpop.f32.mrf.mxu0
  %v227 = vadd.f32 %v82, %v226
  %v228 = vpop.f32.mrf.mxu0
  %229 = vmatprep.mubr.bf16.mxu0 0
  %230 = vmatmul.mubr.bf16.gmra.mxu0 %v125
  %v231 = vpop.f32.mrf.mxu0
  %v232 = vadd.f32 %v82, %v231
  %v233 = vpop.f32.mrf.mxu0
  %v234 = vpop.f32.mrf.mxu0
  %v235 = vadd.f32 %v82, %v234
  %v236 = vpop.f32.mrf.mxu0
  %237 = vmatprep.mubr.bf16.mxu0 0
  %238 = vmatmul.mubr.bf16.gmra.mxu0 %v128
  %v239 = vpop.f32.mrf.mxu0
  %v240 = vadd.f32 %v82, %v239
  %v241 = vpop.f32.mrf.mxu0
  %v242 = vpop.f32.mrf.mxu0
  %v243 = vadd.f32 %v82, %v242
  %v244 = vpop.f32.mrf.mxu0
  %245 = vmatprep.mubr.bf16.mxu0 0
  %246 = vmatmul.mubr.bf16.gmra.mxu0 %v131
  %v247 = vpop.f32.mrf.mxu0
  %v248 = vadd.f32 %v82, %v247
  %v249 = vpop.f32.mrf.mxu0
  %v250 = vpop.f32.mrf.mxu0
  %v251 = vadd.f32 %v82, %v250
  %v252 = vpop.f32.mrf.mxu0
  %253 = vmatprep.mubr.bf16.mxu0 0
  %254 = vmatmul.mubr.bf16.gmra.mxu0 %v134
  %v255 = vpop.f32.mrf.mxu0
  %v256 = vadd.f32 %v82, %v255
  %v257 = vpop.f32.mrf.mxu0
  %v258 = vpop.f32.mrf.mxu0
  %v259 = vadd.f32 %v82, %v258
  %v260 = vpop.f32.mrf.mxu0
  %261 = vmatprep.mubr.bf16.mxu0 0
  %262 = vmatmul.mubr.bf16.gmra.mxu0 %v137
  %v263 = vpop.f32.mrf.mxu0
  %v264 = vadd.f32 %v82, %v263
  %v265 = vpop.f32.mrf.mxu0
  %v266 = vpop.f32.mrf.mxu0
  %v267 = vadd.f32 %v82, %v266
  %v268 = vpop.f32.mrf.mxu0
  %269 = vmatprep.mubr.bf16.mxu0 0
  %270 = vmatmul.mubr.bf16.gmra.mxu0 %v140
  %v271 = vpop.f32.mrf.mxu0
  %v272 = vadd.f32 %v82, %v271
  %v273 = vpop.f32.mrf.mxu0
  %v274 = vpop.f32.mrf.mxu0
  %v275 = vadd.f32 %v82, %v274
  %v276 = vpop.f32.mrf.mxu0
  %277 = vmatprep.mubr.bf16.mxu0 0
  %278 = vmatmul.mubr.bf16.gmra.mxu0 %v143
  %v279 = vpop.f32.mrf.mxu0
  %v280 = vadd.f32 %v82, %v279
  %v281 = vpop.f32.mrf.mxu0
  %v282 = vpop.f32.mrf.mxu0
  %v283 = vadd.f32 %v82, %v282
  %v284 = vpop.f32.mrf.mxu0
  %285 = vmatprep.mubr.bf16.mxu0 0
  %286 = vmatmul.mubr.bf16.gmra.mxu0 %v146
  %v287 = vpop.f32.mrf.mxu0
  %v288 = vadd.f32 %v82, %v287
  %v289 = vpop.f32.mrf.mxu0
  %v290 = vpop.f32.mrf.mxu0
  %v291 = vadd.f32 %v82, %v290
  %v292 = vpop.f32.mrf.mxu0
  %293 = vmatprep.mubr.bf16.mxu0 0
  %294 = vmatmul.mubr.bf16.gmra.mxu0 %v149
  %v295 = vpop.f32.mrf.mxu0
  %v296 = vadd.f32 %v82, %v295
  %v297 = vpop.f32.mrf.mxu0
  %v298 = vpop.f32.mrf.mxu0
  %v299 = vadd.f32 %v82, %v298
  %v300 = vpop.f32.mrf.mxu0
  %301 = vmatprep.mubr.bf16.mxu0 0
  %302 = vmatmul.mubr.bf16.gmra.mxu0 %v152
  %v303 = vpop.f32.mrf.mxu0
  %v304 = vadd.f32 %v82, %v303
  %v305 = vpop.f32.mrf.mxu0
  %v306 = vpop.f32.mrf.mxu0
  %v307 = vadd.f32 %v82, %v306
  %v308 = vpop.f32.mrf.mxu0
  %309 = vmatprep.mubr.bf16.mxu0 0
  %310 = vmatmul.mubr.bf16.gmra.mxu0 %v155
  %v311 = vpop.f32.mrf.mxu0
  %v312 = vadd.f32 %v82, %v311
  %v313 = vpop.f32.mrf.mxu0
  %v314 = vpop.f32.mrf.mxu0
  %v315 = vadd.f32 %v82, %v314
  %v316 = vpop.f32.mrf.mxu0
  %317 = vdwg.mxu0
  %v318 = vmax.f32 %v192, 0.0
  %v319 = vmax.f32 %v195, 0.0
  %v320 = vmax.f32 %v200, 0.0
  %v321 = vmax.f32 %v203, 0.0
  %v322 = vmax.f32 %v208, 0.0
  %v323 = vmax.f32 %v211, 0.0
  %v324 = vmax.f32 %v216, 0.0
  %v325 = vmax.f32 %v219, 0.0
  %v326 = vmax.f32 %v224, 0.0
  %v327 = vmax.f32 %v227, 0.0
  %v328 = vmax.f32 %v232, 0.0
  %v329 = vmax.f32 %v235, 0.0
  %v330 = vmax.f32 %v240, 0.0
  %v331 = vmax.f32 %v243, 0.0
  %v332 = vmax.f32 %v248, 0.0
  %v333 = vmax.f32 %v251, 0.0
  %v334 = vmax.f32 %v256, 0.0
  %v335 = vmax.f32 %v259, 0.0
  %v336 = vmax.f32 %v264, 0.0
  %v337 = vmax.f32 %v267, 0.0
  %v338 = vmax.f32 %v272, 0.0
  %v339 = vmax.f32 %v275, 0.0
  %v340 = vmax.f32 %v280, 0.0
  %v341 = vmax.f32 %v283, 0.0
  %v342 = vmax.f32 %v288, 0.0
  %v343 = vmax.f32 %v291, 0.0
  %v344 = vmax.f32 %v296, 0.0
  %v345 = vmax.f32 %v299, 0.0
  %v346 = vmax.f32 %v304, 0.0
  %v347 = vmax.f32 %v307, 0.0
  %v348 = vmax.f32 %v312, 0.0
  %v349 = vmax.f32 %v315, 0.0
  %v350 = vpack.c.bf16 %v319, %v318
  %v351 = vpack.c.bf16 %v321, %v320
  %v352 = vpack.c.bf16 %v323, %v322
  %v353 = vpack.c.bf16 %v325, %v324
  %v354 = vpack.c.bf16 %v327, %v326
  %v355 = vpack.c.bf16 %v329, %v328
  %v356 = vpack.c.bf16 %v331, %v330
  %v357 = vpack.c.bf16 %v333, %v332
  %v358 = vpack.c.bf16 %v335, %v334
  %v359 = vpack.c.bf16 %v337, %v336
  %v360 = vpack.c.bf16 %v339, %v338
  %v361 = vpack.c.bf16 %v341, %v340
  %v362 = vpack.c.bf16 %v343, %v342
  %v363 = vpack.c.bf16 %v345, %v344
  %v364 = vpack.c.bf16 %v347, %v346
  %v365 = vpack.c.bf16 %v349, %v348
  %v366 = vld [vmem:[%s3] sm:$0xf]
  %v367 = vld [vmem:[%s3 + $0x4] sm:$0xf]
  %v368 = vld [vmem:[%s3 + $0x8] sm:$0xf]
  %v369 = vld [vmem:[%s3 + $0xc] sm:$0xf]
  %v370 = vld [vmem:[%s3 + $0x10] sm:$0xf]
  %v371 = vld [vmem:[%s3 + $0x14] sm:$0xf]
  %v372 = vld [vmem:[%s3 + $0x18] sm:$0xf]
  %v373 = vld [vmem:[%s3 + $0x1c] sm:$0xf]
  %v374 = vld [vmem:[%s3 + $0x20] sm:$0xf]
  %v375 = vld [vmem:[%s3 + $0x24] sm:$0xf]
  %v376 = vld [vmem:[%s3 + $0x28] sm:$0xf]
  %v377 = vld [vmem:[%s3 + $0x2c] sm:$0xf]
  %v378 = vld [vmem:[%s3 + $0x30] sm:$0xf]
  %v379 = vld [vmem:[%s3 + $0x34] sm:$0xf]
  %v380 = vld [vmem:[%s3 + $0x38] sm:$0xf]
  %v381 = vld [vmem:[%s3 + $0x3c] sm:$0xf]
  %v382 = vld [vmem:[%s4] sm:$0x1]
  %v384 = vlaneseq
  %v385 = vshrl.u32 %v384, 7
  %v386 = vsub.s32 0, %v385
  %v387 = vrot.slane %v382, %v386
  %v405 = vunpack.c.l.b16 %v366
  %v406 = vunpack.c.l.b16 %v367
  %v407 = vunpack.c.l.b16 %v368
  %v408 = vunpack.c.l.b16 %v369
  %v409 = vunpack.c.l.b16 %v370
  %v410 = vunpack.c.l.b16 %v371
  %v411 = vunpack.c.l.b16 %v372
  %v412 = vunpack.c.l.b16 %v373
  %v413 = vunpack.c.l.b16 %v374
  %v414 = vunpack.c.l.b16 %v375
  %v415 = vunpack.c.l.b16 %v376
  %v416 = vunpack.c.l.b16 %v377
  %v417 = vunpack.c.l.b16 %v378
  %v418 = vunpack.c.l.b16 %v379
  %v419 = vunpack.c.l.b16 %v380
  %v420 = vunpack.c.l.b16 %v381
  %v421 = vpack.c.b16 %v406, %v405
  %v422 = vpack.c.b16 %v408, %v407
  %v423 = vpack.c.b16 %v410, %v409
  %v424 = vpack.c.b16 %v412, %v411
  %v425 = vpack.c.b16 %v414, %v413
  %v426 = vpack.c.b16 %v416, %v415
  %v427 = vpack.c.b16 %v418, %v417
  %v428 = vpack.c.b16 %v420, %v419
  %437 = vmatprep.subr.bf16.mxu0 0
  %438 = vmatpush1.bf16.msra.mxu0 %v428
  %439 = vmatprep.subr.bf16.mxu0 0
  %440 = vmatpush1.bf16.msra.mxu0 %v427
  %441 = vmatprep.subr.bf16.mxu0 0
  %442 = vmatpush1.bf16.msra.mxu0 %v426
  %443 = vmatprep.subr.bf16.mxu0 0
  %444 = vmatpush1.bf16.msra.mxu0 %v425
  %445 = vmatprep.subr.bf16.mxu0 0
  %446 = vmatpush1.bf16.msra.mxu0 %v424
  %447 = vmatprep.subr.bf16.mxu0 0
  %448 = vmatpush1.bf16.msra.mxu0 %v423
  %449 = vmatprep.subr.bf16.mxu0 0
  %450 = vmatpush1.bf16.msra.mxu0 %v422
  %451 = vmatprep.subr.bf16.mxu0 0
  %452 = vmatpush1.bf16.msra.mxu0 %v421
  %453 = vmatprep.subr.bf16.mxu0 0
  %454 = vmatpush2.bf16.msra.mxu0 0
  %455 = vmatprep.subr.bf16.mxu0 0
  %456 = vmatpush2.bf16.msra.mxu0 0
  %457 = vmatprep.subr.bf16.mxu0 0
  %458 = vmatpush2.bf16.msra.mxu0 0
  %459 = vmatprep.subr.bf16.mxu0 0
  %460 = vmatpush2.bf16.msra.mxu0 0
  %461 = vmatprep.subr.bf16.mxu0 0
  %462 = vmatpush2.bf16.msra.mxu0 0
  %463 = vmatprep.subr.bf16.mxu0 0
  %464 = vmatpush2.bf16.msra.mxu0 0
  %465 = vmatprep.subr.bf16.mxu0 0
  %466 = vmatpush2.bf16.msra.mxu0 0
  %467 = vmatprep.subr.bf16.mxu0 0
  %468 = vmatpush2.bf16.msra.mxu0 0
  %469 = vmatprep.mubr.bf16.mxu0 0
  %470 = vmatmul.mubr.bf16.gmra.mxu0 %v350
  %v471 = vpop.f32.mrf.mxu0
  %v472 = vadd.f32 %v387, %v471
  %v473 = vpop.f32.mrf.mxu0
  %v474 = vpop.f32.mrf.mxu0
  %v475 = vadd.f32 %v387, %v474
  %v476 = vpop.f32.mrf.mxu0
  %477 = vmatprep.mubr.bf16.mxu0 0
  %478 = vmatmul.mubr.bf16.gmra.mxu0 %v351
  %v479 = vpop.f32.mrf.mxu0
  %v480 = vadd.f32 %v387, %v479
  %v481 = vpop.f32.mrf.mxu0
  %v482 = vpop.f32.mrf.mxu0
  %v483 = vadd.f32 %v387, %v482
  %v484 = vpop.f32.mrf.mxu0
  %485 = vmatprep.mubr.bf16.mxu0 0
  %486 = vmatmul.mubr.bf16.gmra.mxu0 %v352
  %v487 = vpop.f32.mrf.mxu0
  %v488 = vadd.f32 %v387, %v487
  %v489 = vpop.f32.mrf.mxu0
  %v490 = vpop.f32.mrf.mxu0
  %v491 = vadd.f32 %v387, %v490
  %v492 = vpop.f32.mrf.mxu0
  %493 = vmatprep.mubr.bf16.mxu0 0
  %494 = vmatmul.mubr.bf16.gmra.mxu0 %v353
  %v495 = vpop.f32.mrf.mxu0
  %v496 = vadd.f32 %v387, %v495
  %v497 = vpop.f32.mrf.mxu0
  %v498 = vpop.f32.mrf.mxu0
  %v499 = vadd.f32 %v387, %v498
  %v500 = vpop.f32.mrf.mxu0
  %501 = vmatprep.mubr.bf16.mxu0 0
  %502 = vmatmul.mubr.bf16.gmra.mxu0 %v354
  %v503 = vpop.f32.mrf.mxu0
  %v504 = vadd.f32 %v387, %v503
  %v505 = vpop.f32.mrf.mxu0
  %v506 = vpop.f32.mrf.mxu0
  %v507 = vadd.f32 %v387, %v506
  %v508 = vpop.f32.mrf.mxu0
  %509 = vmatprep.mubr.bf16.mxu0 0
  %510 = vmatmul.mubr.bf16.gmra.mxu0 %v355
  %v511 = vpop.f32.mrf.mxu0
  %v512 = vadd.f32 %v387, %v511
  %v513 = vpop.f32.mrf.mxu0
  %v514 = vpop.f32.mrf.mxu0
  %v515 = vadd.f32 %v387, %v514
  %v516 = vpop.f32.mrf.mxu0
  %517 = vmatprep.mubr.bf16.mxu0 0
  %518 = vmatmul.mubr.bf16.gmra.mxu0 %v356
  %v519 = vpop.f32.mrf.mxu0
  %v520 = vadd.f32 %v387, %v519
  %v521 = vpop.f32.mrf.mxu0
  %v522 = vpop.f32.mrf.mxu0
  %v523 = vadd.f32 %v387, %v522
  %v524 = vpop.f32.mrf.mxu0
  %525 = vmatprep.mubr.bf16.mxu0 0
  %526 = vmatmul.mubr.bf16.gmra.mxu0 %v357
  %v527 = vpop.f32.mrf.mxu0
  %v528 = vadd.f32 %v387, %v527
  %v529 = vpop.f32.mrf.mxu0
  %v530 = vpop.f32.mrf.mxu0
  %v531 = vadd.f32 %v387, %v530
  %v532 = vpop.f32.mrf.mxu0
  %533 = vmatprep.mubr.bf16.mxu0 0
  %534 = vmatmul.mubr.bf16.gmra.mxu0 %v358
  %v535 = vpop.f32.mrf.mxu0
  %v536 = vadd.f32 %v387, %v535
  %v537 = vpop.f32.mrf.mxu0
  %v538 = vpop.f32.mrf.mxu0
  %v539 = vadd.f32 %v387, %v538
  %v540 = vpop.f32.mrf.mxu0
  %541 = vmatprep.mubr.bf16.mxu0 0
  %542 = vmatmul.mubr.bf16.gmra.mxu0 %v359
  %v543 = vpop.f32.mrf.mxu0
  %v544 = vadd.f32 %v387, %v543
  %v545 = vpop.f32.mrf.mxu0
  %v546 = vpop.f32.mrf.mxu0
  %v547 = vadd.f32 %v387, %v546
  %v548 = vpop.f32.mrf.mxu0
  %549 = vmatprep.mubr.bf16.mxu0 0
  %550 = vmatmul.mubr.bf16.gmra.mxu0 %v360
  %v551 = vpop.f32.mrf.mxu0
  %v552 = vadd.f32 %v387, %v551
  %v553 = vpop.f32.mrf.mxu0
  %v554 = vpop.f32.mrf.mxu0
  %v555 = vadd.f32 %v387, %v554
  %v556 = vpop.f32.mrf.mxu0
  %557 = vmatprep.mubr.bf16.mxu0 0
  %558 = vmatmul.mubr.bf16.gmra.mxu0 %v361
  %v559 = vpop.f32.mrf.mxu0
  %v560 = vadd.f32 %v387, %v559
  %v561 = vpop.f32.mrf.mxu0
  %v562 = vpop.f32.mrf.mxu0
  %v563 = vadd.f32 %v387, %v562
  %v564 = vpop.f32.mrf.mxu0
  %565 = vmatprep.mubr.bf16.mxu0 0
  %566 = vmatmul.mubr.bf16.gmra.mxu0 %v362
  %v567 = vpop.f32.mrf.mxu0
  %v568 = vadd.f32 %v387, %v567
  %v569 = vpop.f32.mrf.mxu0
  %v570 = vpop.f32.mrf.mxu0
  %v571 = vadd.f32 %v387, %v570
  %v572 = vpop.f32.mrf.mxu0
  %573 = vmatprep.mubr.bf16.mxu0 0
  %574 = vmatmul.mubr.bf16.gmra.mxu0 %v363
  %v575 = vpop.f32.mrf.mxu0
  %v576 = vadd.f32 %v387, %v575
  %v577 = vpop.f32.mrf.mxu0
  %v578 = vpop.f32.mrf.mxu0
  %v579 = vadd.f32 %v387, %v578
  %v580 = vpop.f32.mrf.mxu0
  %581 = vmatprep.mubr.bf16.mxu0 0
  %582 = vmatmul.mubr.bf16.gmra.mxu0 %v364
  %v583 = vpop.f32.mrf.mxu0
  %v584 = vadd.f32 %v387, %v583
  %v585 = vpop.f32.mrf.mxu0
  %v586 = vpop.f32.mrf.mxu0
  %v587 = vadd.f32 %v387, %v586
  %v588 = vpop.f32.mrf.mxu0
  %589 = vmatprep.mubr.bf16.mxu0 0
  %590 = vmatmul.mubr.bf16.gmra.mxu0 %v365
  %v591 = vpop.f32.mrf.mxu0
  %v592 = vadd.f32 %v387, %v591
  %v593 = vpop.f32.mrf.mxu0
  %v594 = vpop.f32.mrf.mxu0
  %v595 = vadd.f32 %v387, %v594
  %v596 = vpop.f32.mrf.mxu0
  %597 = vdwg.mxu0
  %vm598 = vcmask 130048
  %599 = vst.msk [vmem:[%s5] sm:$0xff] %vm598, %v472
  %600 = vst.msk [vmem:[%s5 + $0x8] sm:$0xff] %vm598, %v475
  %601 = vst.msk [vmem:[%s5 + $0x10] sm:$0xff] %vm598, %v480
  %602 = vst.msk [vmem:[%s5 + $0x18] sm:$0xff] %vm598, %v483
  %603 = vst.msk [vmem:[%s5 + $0x20] sm:$0xff] %vm598, %v488
  %604 = vst.msk [vmem:[%s5 + $0x28] sm:$0xff] %vm598, %v491
  %605 = vst.msk [vmem:[%s5 + $0x30] sm:$0xff] %vm598, %v496
  %606 = vst.msk [vmem:[%s5 + $0x38] sm:$0xff] %vm598, %v499
  %607 = vst.msk [vmem:[%s5 + $0x40] sm:$0xff] %vm598, %v504
  %608 = vst.msk [vmem:[%s5 + $0x48] sm:$0xff] %vm598, %v507
  %609 = vst.msk [vmem:[%s5 + $0x50] sm:$0xff] %vm598, %v512
  %610 = vst.msk [vmem:[%s5 + $0x58] sm:$0xff] %vm598, %v515
  %611 = vst.msk [vmem:[%s5 + $0x60] sm:$0xff] %vm598, %v520
  %612 = vst.msk [vmem:[%s5 + $0x68] sm:$0xff] %vm598, %v523
  %613 = vst.msk [vmem:[%s5 + $0x70] sm:$0xff] %vm598, %v528
  %614 = vst.msk [vmem:[%s5 + $0x78] sm:$0xff] %vm598, %v531
  %615 = vst.msk [vmem:[%s5 + $0x80] sm:$0xff] %vm598, %v536
  %616 = vst.msk [vmem:[%s5 + $0x88] sm:$0xff] %vm598, %v539
  %617 = vst.msk [vmem:[%s5 + $0x90] sm:$0xff] %vm598, %v544
  %618 = vst.msk [vmem:[%s5 + $0x98] sm:$0xff] %vm598, %v547
  %619 = vst.msk [vmem:[%s5 + $0xa0] sm:$0xff] %vm598, %v552
  %620 = vst.msk [vmem:[%s5 + $0xa8] sm:$0xff] %vm598, %v555
  %621 = vst.msk [vmem:[%s5 + $0xb0] sm:$0xff] %vm598, %v560
  %622 = vst.msk [vmem:[%s5 + $0xb8] sm:$0xff] %vm598, %v563
  %623 = vst.msk [vmem:[%s5 + $0xc0] sm:$0xff] %vm598, %v568
  %624 = vst.msk [vmem:[%s5 + $0xc8] sm:$0xff] %vm598, %v571
  %625 = vst.msk [vmem:[%s5 + $0xd0] sm:$0xff] %vm598, %v576
  %626 = vst.msk [vmem:[%s5 + $0xd8] sm:$0xff] %vm598, %v579
  %627 = vst.msk [vmem:[%s5 + $0xe0] sm:$0xff] %vm598, %v584
  %628 = vst.msk [vmem:[%s5 + $0xe8] sm:$0xff] %vm598, %v587
  %629 = vst.msk [vmem:[%s5 + $0xf0] sm:$0xff] %vm598, %v592
  %630 = vst.msk [vmem:[%s5 + $0xf8] sm:$0xff] %vm598, %v595
  // Predicated region
  $region22: #{tpu_custom_call.1} parent=0 // pred_check
    _
  $region23: #{tpu_custom_call.1} parent=0 // pred_check_branch
    %632 = sbr.rel (0) target = $region25
  $region24: #{tpu_custom_call.1} parent=0 // pred_region
    _
  $region25: #{tpu_custom_call.1} parent=0 // pred_fallthru
    _
  // Predicated region
  $region26: #{tpu_custom_call.1} parent=0 // pred_check
    _
  $region27: #{tpu_custom_call.1} parent=0 // pred_check_branch
    %634 = sbr.rel (0) target = $region29
  $region28: #{tpu_custom_call.1} parent=0 // pred_region
    _
  $region29: #{tpu_custom_call.1} parent=0 // pred_fallthru
    _

</llo_original>
